<compile_context>
chip_gen: v6e
topology: v6e:2x2x1
jax: 0.10.0
libtpu: 0.0.40
codegen_flags: <defaults>
</compile_context>

<pallas_src>
import numpy as np
import jax
import jax.numpy as jnp
from jax import lax
from jax.experimental import pallas as pl
from jax.experimental.pallas import tpu as pltpu


# Matmul-operand dtype (accumulation is always f32). bf16 => single-pass MXU
# matmuls on v6e/v7x; f32 => bit-tight numerics for validation builds.
MATMUL_DTYPE = jnp.bfloat16


def make_lstm_kernel(num_layers, T, B, H):
    """Layers statically unrolled and wavefronted per timestep; time
    recurrence via a peeled step 0 + unrolled fori_loop over steps 1..T-1.

    Weight column order (reordered in the wrapper): [i | f | o | g].
    Ref layout:
      x(T*B,I), wih0(I,4H), whh0(H,4H), b0(1,4H),
      [wcat_l(2H,4H), b_l(1,4H)] * (L-1),
      w_fc(1,H), b_fc(1,) SMEM, out(B,1), proj(T*B,4H) VMEM scratch.
    """

    def kernel(*refs):
        idx = 0
        x_ref = refs[idx]; idx += 1
        wih0_ref = refs[idx]; idx += 1
        whh0_ref = refs[idx]; idx += 1
        b0_ref = refs[idx]; idx += 1
        upper = []
        for _ in range(1, num_layers):
            upper.append((refs[idx], refs[idx + 1]))
            idx += 2
        wfc_ref = refs[idx]; idx += 1
        bfc_ref = refs[idx]; idx += 1
        out_ref = refs[idx]; idx += 1
        proj_ref = refs[idx]; idx += 1

        mm_dtype = whh0_ref.dtype

        # Hoisted layer-0 input projection: one big matmul, off the serial
        # critical path of the recurrence.
        proj_ref[...] = (
            jnp.dot(x_ref[...], wih0_ref[...],
                    preferred_element_type=jnp.float32)
            + b0_ref[...])                                           # (T*B, 4H)

        # Hoist weight / bias loads out of the unrolled loops.
        whh0 = whh0_ref[...]                                         # (H, 4H)
        wcats = [w_ref[...] for (w_ref, _) in upper]                 # (2H, 4H)
        bs = [b_ref[...] for (_, b_ref) in upper]                    # (1, 4H)

        # Whole-vreg activation: lanes [0, 3H) -> sigmoid (i|f|o), [3H, 4H)
        # -> tanh (g).  Mask hoisted (JAX does not CSE broadcast_in_dim).
        lane = lax.broadcasted_iota(jnp.int32, (B, 4 * H), 1)
        sig_mask = lane < 3 * H

        def activate(gates):
            act = jnp.where(sig_mask, jax.nn.sigmoid(gates), jnp.tanh(gates))
            return (act[:, 0 * H:1 * H], act[:, 1 * H:2 * H],
                    act[:, 2 * H:3 * H], act[:, 3 * H:4 * H])

        # ---- peeled t = 0: h = c = 0 for every layer ----------------------
        hs0, cs0 = [], []
        prev_h = None
        for l in range(num_layers):
            if l == 0:
                gates = proj_ref[pl.ds(0, B), :]
            else:
                # h_{l, -1} == 0, so only the W_ih half of wcat contributes.
                gates = (jnp.dot(prev_h.astype(mm_dtype),
                                 wcats[l - 1][:H, :],
                                 preferred_element_type=jnp.float32)
                         + bs[l - 1])
            i_g, f_g, o_g, g_g = activate(gates)
            c = i_g * g_g                       # f * c0 == 0, dropped
            h = o_g * jnp.tanh(c)
            hs0.append(h)
            cs0.append(c)
            prev_h = h

        # ---- steps 1..T-1: per-timestep wavefront across layers -----------
        def step(t, carry):
            hs, cs = carry
            row = pl.multiple_of(t * B, B)      # sublane-aligned row block
            new_hs, new_cs = [], []
            prev_h = None
            for l in range(num_layers):
                if l == 0:
                    gates = (proj_ref[pl.ds(row, B), :]
                             + jnp.dot(hs[0].astype(mm_dtype), whh0,
                                       preferred_element_type=jnp.float32))
                else:
                    # Fused input+recurrent projection: one (B,2H)@(2H,4H)
                    # matmul; depends only on layer l-1 at this same timestep.
                    lhs = jnp.concatenate([prev_h, hs[l]],
                                          axis=-1).astype(mm_dtype)
                    gates = (jnp.dot(lhs, wcats[l - 1],
                                     preferred_element_type=jnp.float32)
                             + bs[l - 1])
                i_g, f_g, o_g, g_g = activate(gates)
                c = f_g * cs[l] + i_g * g_g
                h = o_g * jnp.tanh(c)
                new_hs.append(h)
                new_cs.append(c)
                prev_h = h
            return tuple(new_hs), tuple(new_cs)

        hs, cs = lax.fori_loop(1, T, step, (tuple(hs0), tuple(cs0)),
                               unroll=True)

        # fc(out[:, -1, :]) -> (B, 1): VPU multiply + lane reduce (no MXU
        # tail); b_fc is an SMEM scalar.
        out_ref[...] = (jnp.sum(hs[-1] * wfc_ref[...], axis=-1, keepdims=True)
                        + bfc_ref[0])

    return kernel


def _reorder_gates(w, H):
    """PyTorch gate order along 4H is [i, f, g, o]; reorder to [i, f, o, g]."""
    i = w[..., 0 * H:1 * H]
    f = w[..., 1 * H:2 * H]
    g = w[..., 2 * H:3 * H]
    o = w[..., 3 * H:4 * H]
    return jnp.concatenate([i, f, o, g], axis=-1)


def lstm_forward(x, params, hidden_size, num_layers, matmul_dtype=MATMUL_DTYPE):
    """x: (B, T, I) batch-first, like the PyTorch module. Returns (B, 1)."""
    B, T, I = x.shape
    H = hidden_size
    # Time-major then flatten: row t*B + b  <->  (timestep t, batch b).
    x_flat = jnp.transpose(x, (1, 0, 2)).reshape(T * B, I).astype(matmul_dtype)

    layers = params["layers"]
    wih0, whh0, b0 = layers[0]
    args = [x_flat,
            _reorder_gates(wih0, H).astype(matmul_dtype),
            _reorder_gates(whh0, H).astype(matmul_dtype),
            _reorder_gates(b0, H).astype(jnp.float32)]
    for l in range(1, num_layers):
        wih, whh, b = layers[l]
        # Stacked [W_ih; W_hh] so each upper-layer step is one fused matmul.
        wcat = jnp.concatenate([_reorder_gates(wih, H),
                                _reorder_gates(whh, H)], axis=0)      # (2H, 4H)
        args.append(wcat.astype(matmul_dtype))
        args.append(_reorder_gates(b, H).astype(jnp.float32))
    args.append(jnp.transpose(params["w_fc"]).astype(jnp.float32))    # (1, H)
    args.append(params["b_fc"].reshape(1).astype(jnp.float32))        # (1,) SMEM

    n_in = len(args)
    in_specs = [pl.BlockSpec(memory_space=pltpu.MemorySpace.VMEM)
                for _ in range(n_in - 1)]
    in_specs.append(pl.BlockSpec(memory_space=pltpu.MemorySpace.SMEM))

    kernel = make_lstm_kernel(num_layers, T, B, H)
    return pl.pallas_call(
        kernel,
        out_shape=jax.ShapeDtypeStruct((B, 1), jnp.float32),
        in_specs=in_specs,
        out_specs=pl.BlockSpec(memory_space=pltpu.MemorySpace.VMEM),
        scratch_shapes=[pltpu.VMEM((T * B, 4 * H), jnp.float32)],     # hoisted proj
    )(*args)


def init_params(key, input_size, hidden_size, num_layers):
    """Synthetic init matching nn.LSTM / nn.Linear shapes (weights stored
    transposed as (in_dim, 4H); b = b_ih + b_hh folded; PyTorch gate order)."""
    H = hidden_size
    k = 1.0 / np.sqrt(H)
    keys = jax.random.split(key, 3 * num_layers + 2)
    idx = 0
    layers = []
    for l in range(num_layers):
        in_dim = input_size if l == 0 else H
        wih = jax.random.uniform(keys[idx], (in_dim, 4 * H), jnp.float32, -k, k); idx += 1
        whh = jax.random.uniform(keys[idx], (H, 4 * H), jnp.float32, -k, k); idx += 1
        b = jax.random.uniform(keys[idx], (1, 4 * H), jnp.float32, -k, k); idx += 1
        layers.append((wih, whh, b))
    w_fc = jax.random.uniform(keys[idx], (H, 1), jnp.float32, -k, k); idx += 1
    b_fc = jax.random.uniform(keys[idx], (1, 1), jnp.float32, -k, k)
    return {"layers": layers, "w_fc": w_fc, "b_fc": b_fc}


def lstm_ref(x, params, H):
    """Pure-JAX f32 reference (PyTorch gate order, un-reordered weights)."""
    B, T, _ = x.shape
    layer_in = x
    h = jnp.zeros((B, H), jnp.float32)
    for wih, whh, b in params["layers"]:
        h = jnp.zeros((B, H), jnp.float32)
        c = jnp.zeros((B, H), jnp.float32)
        outs = []
        for t in range(T):
            gates = layer_in[:, t, :] @ wih + h @ whh + b
            i_g = jax.nn.sigmoid(gates[:, 0 * H:1 * H])
            f_g = jax.nn.sigmoid(gates[:, 1 * H:2 * H])
            g_g = jnp.tanh(gates[:, 2 * H:3 * H])
            o_g = jax.nn.sigmoid(gates[:, 3 * H:4 * H])
            c = f_g * c + i_g * g_g
            h = o_g * jnp.tanh(c)
            outs.append(h)
        layer_in = jnp.stack(outs, axis=1)
    return h @ params["w_fc"] + params["b_fc"]


if __name__ == "__main__":
    # Small shapes consistent with the module: batch=8, seq=8, input=8,
    # hidden=32, layers=2.
    B, T, I, H, L = 8, 8, 8, 32, 2

    key = jax.random.PRNGKey(0)
    kx, kp = jax.random.split(key)
    x = jax.random.normal(kx, (B, T, I), jnp.float32)
    params = init_params(kp, I, H, L)

    out = lstm_forward(x, params, hidden_size=H, num_layers=L)
    out = jax.block_until_ready(out)

    ref = jax.block_until_ready(lstm_ref(x, params, H))
    tol = 1e-4 if MATMUL_DTYPE == jnp.float32 else 2e-2
    np.testing.assert_allclose(np.asarray(out), np.asarray(ref), rtol=tol, atol=tol)

    print("KERNEL_OK")
</pallas_src>

<mosaic_0001>
module attributes {stable_mosaic.version = 11 : i64} {
  func.func @kernel(%arg0: memref<64x8xbf16, #tpu.memory_space<vmem>>, %arg1: memref<8x128xbf16, #tpu.memory_space<vmem>>, %arg2: memref<32x128xbf16, #tpu.memory_space<vmem>>, %arg3: memref<1x128xf32, #tpu.memory_space<vmem>>, %arg4: memref<64x128xbf16, #tpu.memory_space<vmem>>, %arg5: memref<1x128xf32, #tpu.memory_space<vmem>>, %arg6: memref<1x32xf32, #tpu.memory_space<vmem>>, %arg7: memref<1xf32, #tpu.memory_space<smem>>, %arg8: memref<8x1xf32, #tpu.memory_space<vmem>>, %arg9: memref<64x128xf32, #tpu.memory_space<vmem>>) attributes {dimension_semantics = [], scalar_prefetch = 0 : i64, scratch_operands = 1 : i64, tpu.core_type = #tpu.core_type<tc>} {
    %c0 = arith.constant 0 : index
    %c0_0 = arith.constant 0 : index
    %0 = vector.load %arg0[%c0, %c0_0] : memref<64x8xbf16, #tpu.memory_space<vmem>>, vector<64x8xbf16>
    %c0_1 = arith.constant 0 : index
    %c0_2 = arith.constant 0 : index
    %1 = vector.load %arg1[%c0_1, %c0_2] : memref<8x128xbf16, #tpu.memory_space<vmem>>, vector<8x128xbf16>
    %cst = arith.constant dense<0.000000e+00> : vector<64x128xf32>
    %2 = tpu.matmul %0, %1, %cst {dimension_numbers = #tpu.dot_dimension_numbers<[1], [0], [0], [1], [0, 0, 1, 1], [], []>} : vector<64x8xbf16>, vector<8x128xbf16>, vector<64x128xf32> -> vector<64x128xf32>
    %c0_3 = arith.constant 0 : index
    %c0_4 = arith.constant 0 : index
    %3 = vector.load %arg3[%c0_3, %c0_4] : memref<1x128xf32, #tpu.memory_space<vmem>>, vector<1x128xf32>
    %4 = vector.broadcast %3 : vector<1x128xf32> to vector<64x128xf32>
    %5 = arith.addf %2, %4 : vector<64x128xf32>
    %c0_5 = arith.constant 0 : index
    %c0_6 = arith.constant 0 : index
    %6 = vector.load %arg9[%c0_5, %c0_6] : memref<64x128xf32, #tpu.memory_space<vmem>>, vector<64x128xf32>
    tpu.vector_store %arg9[%c0_5, %c0_6], %5 {strides = array<i32>} : memref<64x128xf32, #tpu.memory_space<vmem>>, vector<64x128xf32>,
    %c0_7 = arith.constant 0 : index
    %c0_8 = arith.constant 0 : index
    %7 = vector.load %arg2[%c0_7, %c0_8] : memref<32x128xbf16, #tpu.memory_space<vmem>>, vector<32x128xbf16>
    %c0_9 = arith.constant 0 : index
    %c0_10 = arith.constant 0 : index
    %8 = vector.load %arg4[%c0_9, %c0_10] : memref<64x128xbf16, #tpu.memory_space<vmem>>, vector<64x128xbf16>
    %c0_11 = arith.constant 0 : index
    %c0_12 = arith.constant 0 : index
    %9 = vector.load %arg5[%c0_11, %c0_12] : memref<1x128xf32, #tpu.memory_space<vmem>>, vector<1x128xf32>
    %10 = tpu.iota {dimensions = array<i32: 1>} : vector<8x128xi32>
    %c96_i32 = arith.constant 96 : i32
    %11 = vector.broadcast %c96_i32 : i32 to vector<8x128xi32>
    %12 = arith.cmpi slt, %10, %11 : vector<8x128xi32>
    %c0_13 = arith.constant 0 : index
    %c0_14 = arith.constant 0 : index
    %13 = vector.load %arg9[%c0_13, %c0_14] : memref<64x128xf32, #tpu.memory_space<vmem>>, vector<8x128xf32>
    %14 = arith.negf %13 : vector<8x128xf32>
    %15 = math.exp %14 : vector<8x128xf32>
    %cst_15 = arith.constant 1.000000e+00 : f32
    %16 = vector.broadcast %cst_15 : f32 to vector<8x128xf32>
    %17 = arith.addf %16, %15 : vector<8x128xf32>
    %18 = arith.divf %16, %17 : vector<8x128xf32>
    %19 = math.tanh %13 : vector<8x128xf32>
    %20 = arith.select %12, %18, %19 : vector<8x128xi1>, vector<8x128xf32>
    %21 = vector.extract_strided_slice %20 {offsets = [0, 0], sizes = [8, 32], strides = [1, 1]} : vector<8x128xf32> to vector<8x32xf32>
    %22 = vector.extract_strided_slice %20 {offsets = [0, 64], sizes = [8, 32], strides = [1, 1]} : vector<8x128xf32> to vector<8x32xf32>
    %23 = vector.extract_strided_slice %20 {offsets = [0, 96], sizes = [8, 32], strides = [1, 1]} : vector<8x128xf32> to vector<8x32xf32>
    %24 = arith.mulf %21, %23 : vector<8x32xf32>
    %25 = math.tanh %24 : vector<8x32xf32>
    %26 = arith.mulf %22, %25 : vector<8x32xf32>
    %27 = arith.truncf %26 : vector<8x32xf32> to vector<8x32xbf16>
    %28 = vector.extract_strided_slice %8 {offsets = [0, 0], sizes = [32, 128], strides = [1, 1]} : vector<64x128xbf16> to vector<32x128xbf16>
    %cst_16 = arith.constant dense<0.000000e+00> : vector<8x128xf32>
    %29 = tpu.matmul %27, %28, %cst_16 {dimension_numbers = #tpu.dot_dimension_numbers<[1], [0], [0], [1], [0, 0, 1, 1], [], []>} : vector<8x32xbf16>, vector<32x128xbf16>, vector<8x128xf32> -> vector<8x128xf32>
    %30 = vector.broadcast %9 : vector<1x128xf32> to vector<8x128xf32>
    %31 = arith.addf %29, %30 : vector<8x128xf32>
    %32 = arith.negf %31 : vector<8x128xf32>
    %33 = math.exp %32 : vector<8x128xf32>
    %cst_17 = arith.constant 1.000000e+00 : f32
    %34 = vector.broadcast %cst_17 : f32 to vector<8x128xf32>
    %35 = arith.addf %34, %33 : vector<8x128xf32>
    %36 = arith.divf %34, %35 : vector<8x128xf32>
    %37 = math.tanh %31 : vector<8x128xf32>
    %38 = arith.select %12, %36, %37 : vector<8x128xi1>, vector<8x128xf32>
    %39 = vector.extract_strided_slice %38 {offsets = [0, 0], sizes = [8, 32], strides = [1, 1]} : vector<8x128xf32> to vector<8x32xf32>
    %40 = vector.extract_strided_slice %38 {offsets = [0, 64], sizes = [8, 32], strides = [1, 1]} : vector<8x128xf32> to vector<8x32xf32>
    %41 = vector.extract_strided_slice %38 {offsets = [0, 96], sizes = [8, 32], strides = [1, 1]} : vector<8x128xf32> to vector<8x32xf32>
    %42 = arith.mulf %39, %41 : vector<8x32xf32>
    %43 = math.tanh %42 : vector<8x32xf32>
    %44 = arith.mulf %40, %43 : vector<8x32xf32>
    %c1_i32 = arith.constant 1 : i32
    %c8_i32 = arith.constant 8 : i32
    %45 = arith.muli %c1_i32, %c8_i32 : i32
    %46 = tpu.assume_multiple %45, 8 : i32
    %47 = arith.index_cast %46 : i32 to index
    %c0_18 = arith.constant 0 : index
    %48 = vector.load %arg9[%47, %c0_18] : memref<64x128xf32, #tpu.memory_space<vmem>>, vector<8x128xf32>
    %49 = arith.truncf %26 : vector<8x32xf32> to vector<8x32xbf16>
    %cst_19 = arith.constant dense<0.000000e+00> : vector<8x128xf32>
    %50 = tpu.matmul %49, %7, %cst_19 {dimension_numbers = #tpu.dot_dimension_numbers<[1], [0], [0], [1], [0, 0, 1, 1], [], []>} : vector<8x32xbf16>, vector<32x128xbf16>, vector<8x128xf32> -> vector<8x128xf32>
    %51 = arith.addf %48, %50 : vector<8x128xf32>
    %52 = arith.negf %51 : vector<8x128xf32>
    %53 = math.exp %52 : vector<8x128xf32>
    %cst_20 = arith.constant 1.000000e+00 : f32
    %54 = vector.broadcast %cst_20 : f32 to vector<8x128xf32>
    %55 = arith.addf %54, %53 : vector<8x128xf32>
    %56 = arith.divf %54, %55 : vector<8x128xf32>
    %57 = math.tanh %51 : vector<8x128xf32>
    %58 = arith.select %12, %56, %57 : vector<8x128xi1>, vector<8x128xf32>
    %59 = vector.extract_strided_slice %58 {offsets = [0, 0], sizes = [8, 32], strides = [1, 1]} : vector<8x128xf32> to vector<8x32xf32>
    %60 = vector.extract_strided_slice %58 {offsets = [0, 32], sizes = [8, 32], strides = [1, 1]} : vector<8x128xf32> to vector<8x32xf32>
    %61 = vector.extract_strided_slice %58 {offsets = [0, 64], sizes = [8, 32], strides = [1, 1]} : vector<8x128xf32> to vector<8x32xf32>
    %62 = vector.extract_strided_slice %58 {offsets = [0, 96], sizes = [8, 32], strides = [1, 1]} : vector<8x128xf32> to vector<8x32xf32>
    %63 = arith.mulf %60, %24 : vector<8x32xf32>
    %64 = arith.mulf %59, %62 : vector<8x32xf32>
    %65 = arith.addf %63, %64 : vector<8x32xf32>
    %66 = math.tanh %65 : vector<8x32xf32>
    %67 = arith.mulf %61, %66 : vector<8x32xf32>
    %68 = tpu.concatenate %67, %44 in 1 : vector<8x32xf32>, vector<8x32xf32> -> vector<8x64xf32>
    %69 = arith.truncf %68 : vector<8x64xf32> to vector<8x64xbf16>
    %cst_21 = arith.constant dense<0.000000e+00> : vector<8x128xf32>
    %70 = tpu.matmul %69, %8, %cst_21 {dimension_numbers = #tpu.dot_dimension_numbers<[1], [0], [0], [1], [0, 0, 1, 1], [], []>} : vector<8x64xbf16>, vector<64x128xbf16>, vector<8x128xf32> -> vector<8x128xf32>
    %71 = vector.broadcast %9 : vector<1x128xf32> to vector<8x128xf32>
    %72 = arith.addf %70, %71 : vector<8x128xf32>
    %73 = arith.negf %72 : vector<8x128xf32>
    %74 = math.exp %73 : vector<8x128xf32>
    %cst_22 = arith.constant 1.000000e+00 : f32
    %75 = vector.broadcast %cst_22 : f32 to vector<8x128xf32>
    %76 = arith.addf %75, %74 : vector<8x128xf32>
    %77 = arith.divf %75, %76 : vector<8x128xf32>
    %78 = math.tanh %72 : vector<8x128xf32>
    %79 = arith.select %12, %77, %78 : vector<8x128xi1>, vector<8x128xf32>
    %80 = vector.extract_strided_slice %79 {offsets = [0, 0], sizes = [8, 32], strides = [1, 1]} : vector<8x128xf32> to vector<8x32xf32>
    %81 = vector.extract_strided_slice %79 {offsets = [0, 32], sizes = [8, 32], strides = [1, 1]} : vector<8x128xf32> to vector<8x32xf32>
    %82 = vector.extract_strided_slice %79 {offsets = [0, 64], sizes = [8, 32], strides = [1, 1]} : vector<8x128xf32> to vector<8x32xf32>
    %83 = vector.extract_strided_slice %79 {offsets = [0, 96], sizes = [8, 32], strides = [1, 1]} : vector<8x128xf32> to vector<8x32xf32>
    %84 = arith.mulf %81, %42 : vector<8x32xf32>
    %85 = arith.mulf %80, %83 : vector<8x32xf32>
    %86 = arith.addf %84, %85 : vector<8x32xf32>
    %87 = math.tanh %86 : vector<8x32xf32>
    %88 = arith.mulf %82, %87 : vector<8x32xf32>
    %c2_i32 = arith.constant 2 : i32
    %c8_i32_23 = arith.constant 8 : i32
    %89 = arith.muli %c2_i32, %c8_i32_23 : i32
    %90 = tpu.assume_multiple %89, 8 : i32
    %91 = arith.index_cast %90 : i32 to index
    %c0_24 = arith.constant 0 : index
    %92 = vector.load %arg9[%91, %c0_24] : memref<64x128xf32, #tpu.memory_space<vmem>>, vector<8x128xf32>
    %93 = arith.truncf %67 : vector<8x32xf32> to vector<8x32xbf16>
    %cst_25 = arith.constant dense<0.000000e+00> : vector<8x128xf32>
    %94 = tpu.matmul %93, %7, %cst_25 {dimension_numbers = #tpu.dot_dimension_numbers<[1], [0], [0], [1], [0, 0, 1, 1], [], []>} : vector<8x32xbf16>, vector<32x128xbf16>, vector<8x128xf32> -> vector<8x128xf32>
    %95 = arith.addf %92, %94 : vector<8x128xf32>
    %96 = arith.negf %95 : vector<8x128xf32>
    %97 = math.exp %96 : vector<8x128xf32>
    %cst_26 = arith.constant 1.000000e+00 : f32
    %98 = vector.broadcast %cst_26 : f32 to vector<8x128xf32>
    %99 = arith.addf %98, %97 : vector<8x128xf32>
    %100 = arith.divf %98, %99 : vector<8x128xf32>
    %101 = math.tanh %95 : vector<8x128xf32>
    %102 = arith.select %12, %100, %101 : vector<8x128xi1>, vector<8x128xf32>
    %103 = vector.extract_strided_slice %102 {offsets = [0, 0], sizes = [8, 32], strides = [1, 1]} : vector<8x128xf32> to vector<8x32xf32>
    %104 = vector.extract_strided_slice %102 {offsets = [0, 32], sizes = [8, 32], strides = [1, 1]} : vector<8x128xf32> to vector<8x32xf32>
    %105 = vector.extract_strided_slice %102 {offsets = [0, 64], sizes = [8, 32], strides = [1, 1]} : vector<8x128xf32> to vector<8x32xf32>
    %106 = vector.extract_strided_slice %102 {offsets = [0, 96], sizes = [8, 32], strides = [1, 1]} : vector<8x128xf32> to vector<8x32xf32>
    %107 = arith.mulf %104, %65 : vector<8x32xf32>
    %108 = arith.mulf %103, %106 : vector<8x32xf32>
    %109 = arith.addf %107, %108 : vector<8x32xf32>
    %110 = math.tanh %109 : vector<8x32xf32>
    %111 = arith.mulf %105, %110 : vector<8x32xf32>
    %112 = tpu.concatenate %111, %88 in 1 : vector<8x32xf32>, vector<8x32xf32> -> vector<8x64xf32>
    %113 = arith.truncf %112 : vector<8x64xf32> to vector<8x64xbf16>
    %cst_27 = arith.constant dense<0.000000e+00> : vector<8x128xf32>
    %114 = tpu.matmul %113, %8, %cst_27 {dimension_numbers = #tpu.dot_dimension_numbers<[1], [0], [0], [1], [0, 0, 1, 1], [], []>} : vector<8x64xbf16>, vector<64x128xbf16>, vector<8x128xf32> -> vector<8x128xf32>
    %115 = vector.broadcast %9 : vector<1x128xf32> to vector<8x128xf32>
    %116 = arith.addf %114, %115 : vector<8x128xf32>
    %117 = arith.negf %116 : vector<8x128xf32>
    %118 = math.exp %117 : vector<8x128xf32>
    %cst_28 = arith.constant 1.000000e+00 : f32
    %119 = vector.broadcast %cst_28 : f32 to vector<8x128xf32>
    %120 = arith.addf %119, %118 : vector<8x128xf32>
    %121 = arith.divf %119, %120 : vector<8x128xf32>
    %122 = math.tanh %116 : vector<8x128xf32>
    %123 = arith.select %12, %121, %122 : vector<8x128xi1>, vector<8x128xf32>
    %124 = vector.extract_strided_slice %123 {offsets = [0, 0], sizes = [8, 32], strides = [1, 1]} : vector<8x128xf32> to vector<8x32xf32>
    %125 = vector.extract_strided_slice %123 {offsets = [0, 32], sizes = [8, 32], strides = [1, 1]} : vector<8x128xf32> to vector<8x32xf32>
    %126 = vector.extract_strided_slice %123 {offsets = [0, 64], sizes = [8, 32], strides = [1, 1]} : vector<8x128xf32> to vector<8x32xf32>
    %127 = vector.extract_strided_slice %123 {offsets = [0, 96], sizes = [8, 32], strides = [1, 1]} : vector<8x128xf32> to vector<8x32xf32>
    %128 = arith.mulf %125, %86 : vector<8x32xf32>
    %129 = arith.mulf %124, %127 : vector<8x32xf32>
    %130 = arith.addf %128, %129 : vector<8x32xf32>
    %131 = math.tanh %130 : vector<8x32xf32>
    %132 = arith.mulf %126, %131 : vector<8x32xf32>
    %c3_i32 = arith.constant 3 : i32
    %c8_i32_29 = arith.constant 8 : i32
    %133 = arith.muli %c3_i32, %c8_i32_29 : i32
    %134 = tpu.assume_multiple %133, 8 : i32
    %135 = arith.index_cast %134 : i32 to index
    %c0_30 = arith.constant 0 : index
    %136 = vector.load %arg9[%135, %c0_30] : memref<64x128xf32, #tpu.memory_space<vmem>>, vector<8x128xf32>
    %137 = arith.truncf %111 : vector<8x32xf32> to vector<8x32xbf16>
    %cst_31 = arith.constant dense<0.000000e+00> : vector<8x128xf32>
    %138 = tpu.matmul %137, %7, %cst_31 {dimension_numbers = #tpu.dot_dimension_numbers<[1], [0], [0], [1], [0, 0, 1, 1], [], []>} : vector<8x32xbf16>, vector<32x128xbf16>, vector<8x128xf32> -> vector<8x128xf32>
    %139 = arith.addf %136, %138 : vector<8x128xf32>
    %140 = arith.negf %139 : vector<8x128xf32>
    %141 = math.exp %140 : vector<8x128xf32>
    %cst_32 = arith.constant 1.000000e+00 : f32
    %142 = vector.broadcast %cst_32 : f32 to vector<8x128xf32>
    %143 = arith.addf %142, %141 : vector<8x128xf32>
    %144 = arith.divf %142, %143 : vector<8x128xf32>
    %145 = math.tanh %139 : vector<8x128xf32>
    %146 = arith.select %12, %144, %145 : vector<8x128xi1>, vector<8x128xf32>
    %147 = vector.extract_strided_slice %146 {offsets = [0, 0], sizes = [8, 32], strides = [1, 1]} : vector<8x128xf32> to vector<8x32xf32>
    %148 = vector.extract_strided_slice %146 {offsets = [0, 32], sizes = [8, 32], strides = [1, 1]} : vector<8x128xf32> to vector<8x32xf32>
    %149 = vector.extract_strided_slice %146 {offsets = [0, 64], sizes = [8, 32], strides = [1, 1]} : vector<8x128xf32> to vector<8x32xf32>
    %150 = vector.extract_strided_slice %146 {offsets = [0, 96], sizes = [8, 32], strides = [1, 1]} : vector<8x128xf32> to vector<8x32xf32>
    %151 = arith.mulf %148, %109 : vector<8x32xf32>
    %152 = arith.mulf %147, %150 : vector<8x32xf32>
    %153 = arith.addf %151, %152 : vector<8x32xf32>
    %154 = math.tanh %153 : vector<8x32xf32>
    %155 = arith.mulf %149, %154 : vector<8x32xf32>
    %156 = tpu.concatenate %155, %132 in 1 : vector<8x32xf32>, vector<8x32xf32> -> vector<8x64xf32>
    %157 = arith.truncf %156 : vector<8x64xf32> to vector<8x64xbf16>
    %cst_33 = arith.constant dense<0.000000e+00> : vector<8x128xf32>
    %158 = tpu.matmul %157, %8, %cst_33 {dimension_numbers = #tpu.dot_dimension_numbers<[1], [0], [0], [1], [0, 0, 1, 1], [], []>} : vector<8x64xbf16>, vector<64x128xbf16>, vector<8x128xf32> -> vector<8x128xf32>
    %159 = vector.broadcast %9 : vector<1x128xf32> to vector<8x128xf32>
    %160 = arith.addf %158, %159 : vector<8x128xf32>
    %161 = arith.negf %160 : vector<8x128xf32>
    %162 = math.exp %161 : vector<8x128xf32>
    %cst_34 = arith.constant 1.000000e+00 : f32
    %163 = vector.broadcast %cst_34 : f32 to vector<8x128xf32>
    %164 = arith.addf %163, %162 : vector<8x128xf32>
    %165 = arith.divf %163, %164 : vector<8x128xf32>
    %166 = math.tanh %160 : vector<8x128xf32>
    %167 = arith.select %12, %165, %166 : vector<8x128xi1>, vector<8x128xf32>
    %168 = vector.extract_strided_slice %167 {offsets = [0, 0], sizes = [8, 32], strides = [1, 1]} : vector<8x128xf32> to vector<8x32xf32>
    %169 = vector.extract_strided_slice %167 {offsets = [0, 32], sizes = [8, 32], strides = [1, 1]} : vector<8x128xf32> to vector<8x32xf32>
    %170 = vector.extract_strided_slice %167 {offsets = [0, 64], sizes = [8, 32], strides = [1, 1]} : vector<8x128xf32> to vector<8x32xf32>
    %171 = vector.extract_strided_slice %167 {offsets = [0, 96], sizes = [8, 32], strides = [1, 1]} : vector<8x128xf32> to vector<8x32xf32>
    %172 = arith.mulf %169, %130 : vector<8x32xf32>
    %173 = arith.mulf %168, %171 : vector<8x32xf32>
    %174 = arith.addf %172, %173 : vector<8x32xf32>
    %175 = math.tanh %174 : vector<8x32xf32>
    %176 = arith.mulf %170, %175 : vector<8x32xf32>
    %c4_i32 = arith.constant 4 : i32
    %c8_i32_35 = arith.constant 8 : i32
    %177 = arith.muli %c4_i32, %c8_i32_35 : i32
    %178 = tpu.assume_multiple %177, 8 : i32
    %179 = arith.index_cast %178 : i32 to index
    %c0_36 = arith.constant 0 : index
    %180 = vector.load %arg9[%179, %c0_36] : memref<64x128xf32, #tpu.memory_space<vmem>>, vector<8x128xf32>
    %181 = arith.truncf %155 : vector<8x32xf32> to vector<8x32xbf16>
    %cst_37 = arith.constant dense<0.000000e+00> : vector<8x128xf32>
    %182 = tpu.matmul %181, %7, %cst_37 {dimension_numbers = #tpu.dot_dimension_numbers<[1], [0], [0], [1], [0, 0, 1, 1], [], []>} : vector<8x32xbf16>, vector<32x128xbf16>, vector<8x128xf32> -> vector<8x128xf32>
    %183 = arith.addf %180, %182 : vector<8x128xf32>
    %184 = arith.negf %183 : vector<8x128xf32>
    %185 = math.exp %184 : vector<8x128xf32>
    %cst_38 = arith.constant 1.000000e+00 : f32
    %186 = vector.broadcast %cst_38 : f32 to vector<8x128xf32>
    %187 = arith.addf %186, %185 : vector<8x128xf32>
    %188 = arith.divf %186, %187 : vector<8x128xf32>
    %189 = math.tanh %183 : vector<8x128xf32>
    %190 = arith.select %12, %188, %189 : vector<8x128xi1>, vector<8x128xf32>
    %191 = vector.extract_strided_slice %190 {offsets = [0, 0], sizes = [8, 32], strides = [1, 1]} : vector<8x128xf32> to vector<8x32xf32>
    %192 = vector.extract_strided_slice %190 {offsets = [0, 32], sizes = [8, 32], strides = [1, 1]} : vector<8x128xf32> to vector<8x32xf32>
    %193 = vector.extract_strided_slice %190 {offsets = [0, 64], sizes = [8, 32], strides = [1, 1]} : vector<8x128xf32> to vector<8x32xf32>
    %194 = vector.extract_strided_slice %190 {offsets = [0, 96], sizes = [8, 32], strides = [1, 1]} : vector<8x128xf32> to vector<8x32xf32>
    %195 = arith.mulf %192, %153 : vector<8x32xf32>
    %196 = arith.mulf %191, %194 : vector<8x32xf32>
    %197 = arith.addf %195, %196 : vector<8x32xf32>
    %198 = math.tanh %197 : vector<8x32xf32>
    %199 = arith.mulf %193, %198 : vector<8x32xf32>
    %200 = tpu.concatenate %199, %176 in 1 : vector<8x32xf32>, vector<8x32xf32> -> vector<8x64xf32>
    %201 = arith.truncf %200 : vector<8x64xf32> to vector<8x64xbf16>
    %cst_39 = arith.constant dense<0.000000e+00> : vector<8x128xf32>
    %202 = tpu.matmul %201, %8, %cst_39 {dimension_numbers = #tpu.dot_dimension_numbers<[1], [0], [0], [1], [0, 0, 1, 1], [], []>} : vector<8x64xbf16>, vector<64x128xbf16>, vector<8x128xf32> -> vector<8x128xf32>
    %203 = vector.broadcast %9 : vector<1x128xf32> to vector<8x128xf32>
    %204 = arith.addf %202, %203 : vector<8x128xf32>
    %205 = arith.negf %204 : vector<8x128xf32>
    %206 = math.exp %205 : vector<8x128xf32>
    %cst_40 = arith.constant 1.000000e+00 : f32
    %207 = vector.broadcast %cst_40 : f32 to vector<8x128xf32>
    %208 = arith.addf %207, %206 : vector<8x128xf32>
    %209 = arith.divf %207, %208 : vector<8x128xf32>
    %210 = math.tanh %204 : vector<8x128xf32>
    %211 = arith.select %12, %209, %210 : vector<8x128xi1>, vector<8x128xf32>
    %212 = vector.extract_strided_slice %211 {offsets = [0, 0], sizes = [8, 32], strides = [1, 1]} : vector<8x128xf32> to vector<8x32xf32>
    %213 = vector.extract_strided_slice %211 {offsets = [0, 32], sizes = [8, 32], strides = [1, 1]} : vector<8x128xf32> to vector<8x32xf32>
    %214 = vector.extract_strided_slice %211 {offsets = [0, 64], sizes = [8, 32], strides = [1, 1]} : vector<8x128xf32> to vector<8x32xf32>
    %215 = vector.extract_strided_slice %211 {offsets = [0, 96], sizes = [8, 32], strides = [1, 1]} : vector<8x128xf32> to vector<8x32xf32>
    %216 = arith.mulf %213, %174 : vector<8x32xf32>
    %217 = arith.mulf %212, %215 : vector<8x32xf32>
    %218 = arith.addf %216, %217 : vector<8x32xf32>
    %219 = math.tanh %218 : vector<8x32xf32>
    %220 = arith.mulf %214, %219 : vector<8x32xf32>
    %c5_i32 = arith.constant 5 : i32
    %c8_i32_41 = arith.constant 8 : i32
    %221 = arith.muli %c5_i32, %c8_i32_41 : i32
    %222 = tpu.assume_multiple %221, 8 : i32
    %223 = arith.index_cast %222 : i32 to index
    %c0_42 = arith.constant 0 : index
    %224 = vector.load %arg9[%223, %c0_42] : memref<64x128xf32, #tpu.memory_space<vmem>>, vector<8x128xf32>
    %225 = arith.truncf %199 : vector<8x32xf32> to vector<8x32xbf16>
    %cst_43 = arith.constant dense<0.000000e+00> : vector<8x128xf32>
    %226 = tpu.matmul %225, %7, %cst_43 {dimension_numbers = #tpu.dot_dimension_numbers<[1], [0], [0], [1], [0, 0, 1, 1], [], []>} : vector<8x32xbf16>, vector<32x128xbf16>, vector<8x128xf32> -> vector<8x128xf32>
    %227 = arith.addf %224, %226 : vector<8x128xf32>
    %228 = arith.negf %227 : vector<8x128xf32>
    %229 = math.exp %228 : vector<8x128xf32>
    %cst_44 = arith.constant 1.000000e+00 : f32
    %230 = vector.broadcast %cst_44 : f32 to vector<8x128xf32>
    %231 = arith.addf %230, %229 : vector<8x128xf32>
    %232 = arith.divf %230, %231 : vector<8x128xf32>
    %233 = math.tanh %227 : vector<8x128xf32>
    %234 = arith.select %12, %232, %233 : vector<8x128xi1>, vector<8x128xf32>
    %235 = vector.extract_strided_slice %234 {offsets = [0, 0], sizes = [8, 32], strides = [1, 1]} : vector<8x128xf32> to vector<8x32xf32>
    %236 = vector.extract_strided_slice %234 {offsets = [0, 32], sizes = [8, 32], strides = [1, 1]} : vector<8x128xf32> to vector<8x32xf32>
    %237 = vector.extract_strided_slice %234 {offsets = [0, 64], sizes = [8, 32], strides = [1, 1]} : vector<8x128xf32> to vector<8x32xf32>
    %238 = vector.extract_strided_slice %234 {offsets = [0, 96], sizes = [8, 32], strides = [1, 1]} : vector<8x128xf32> to vector<8x32xf32>
    %239 = arith.mulf %236, %197 : vector<8x32xf32>
    %240 = arith.mulf %235, %238 : vector<8x32xf32>
    %241 = arith.addf %239, %240 : vector<8x32xf32>
    %242 = math.tanh %241 : vector<8x32xf32>
    %243 = arith.mulf %237, %242 : vector<8x32xf32>
    %244 = tpu.concatenate %243, %220 in 1 : vector<8x32xf32>, vector<8x32xf32> -> vector<8x64xf32>
    %245 = arith.truncf %244 : vector<8x64xf32> to vector<8x64xbf16>
    %cst_45 = arith.constant dense<0.000000e+00> : vector<8x128xf32>
    %246 = tpu.matmul %245, %8, %cst_45 {dimension_numbers = #tpu.dot_dimension_numbers<[1], [0], [0], [1], [0, 0, 1, 1], [], []>} : vector<8x64xbf16>, vector<64x128xbf16>, vector<8x128xf32> -> vector<8x128xf32>
    %247 = vector.broadcast %9 : vector<1x128xf32> to vector<8x128xf32>
    %248 = arith.addf %246, %247 : vector<8x128xf32>
    %249 = arith.negf %248 : vector<8x128xf32>
    %250 = math.exp %249 : vector<8x128xf32>
    %cst_46 = arith.constant 1.000000e+00 : f32
    %251 = vector.broadcast %cst_46 : f32 to vector<8x128xf32>
    %252 = arith.addf %251, %250 : vector<8x128xf32>
    %253 = arith.divf %251, %252 : vector<8x128xf32>
    %254 = math.tanh %248 : vector<8x128xf32>
    %255 = arith.select %12, %253, %254 : vector<8x128xi1>, vector<8x128xf32>
    %256 = vector.extract_strided_slice %255 {offsets = [0, 0], sizes = [8, 32], strides = [1, 1]} : vector<8x128xf32> to vector<8x32xf32>
    %257 = vector.extract_strided_slice %255 {offsets = [0, 32], sizes = [8, 32], strides = [1, 1]} : vector<8x128xf32> to vector<8x32xf32>
    %258 = vector.extract_strided_slice %255 {offsets = [0, 64], sizes = [8, 32], strides = [1, 1]} : vector<8x128xf32> to vector<8x32xf32>
    %259 = vector.extract_strided_slice %255 {offsets = [0, 96], sizes = [8, 32], strides = [1, 1]} : vector<8x128xf32> to vector<8x32xf32>
    %260 = arith.mulf %257, %218 : vector<8x32xf32>
    %261 = arith.mulf %256, %259 : vector<8x32xf32>
    %262 = arith.addf %260, %261 : vector<8x32xf32>
    %263 = math.tanh %262 : vector<8x32xf32>
    %264 = arith.mulf %258, %263 : vector<8x32xf32>
    %c6_i32 = arith.constant 6 : i32
    %c8_i32_47 = arith.constant 8 : i32
    %265 = arith.muli %c6_i32, %c8_i32_47 : i32
    %266 = tpu.assume_multiple %265, 8 : i32
    %267 = arith.index_cast %266 : i32 to index
    %c0_48 = arith.constant 0 : index
    %268 = vector.load %arg9[%267, %c0_48] : memref<64x128xf32, #tpu.memory_space<vmem>>, vector<8x128xf32>
    %269 = arith.truncf %243 : vector<8x32xf32> to vector<8x32xbf16>
    %cst_49 = arith.constant dense<0.000000e+00> : vector<8x128xf32>
    %270 = tpu.matmul %269, %7, %cst_49 {dimension_numbers = #tpu.dot_dimension_numbers<[1], [0], [0], [1], [0, 0, 1, 1], [], []>} : vector<8x32xbf16>, vector<32x128xbf16>, vector<8x128xf32> -> vector<8x128xf32>
    %271 = arith.addf %268, %270 : vector<8x128xf32>
    %272 = arith.negf %271 : vector<8x128xf32>
    %273 = math.exp %272 : vector<8x128xf32>
    %cst_50 = arith.constant 1.000000e+00 : f32
    %274 = vector.broadcast %cst_50 : f32 to vector<8x128xf32>
    %275 = arith.addf %274, %273 : vector<8x128xf32>
    %276 = arith.divf %274, %275 : vector<8x128xf32>
    %277 = math.tanh %271 : vector<8x128xf32>
    %278 = arith.select %12, %276, %277 : vector<8x128xi1>, vector<8x128xf32>
    %279 = vector.extract_strided_slice %278 {offsets = [0, 0], sizes = [8, 32], strides = [1, 1]} : vector<8x128xf32> to vector<8x32xf32>
    %280 = vector.extract_strided_slice %278 {offsets = [0, 32], sizes = [8, 32], strides = [1, 1]} : vector<8x128xf32> to vector<8x32xf32>
    %281 = vector.extract_strided_slice %278 {offsets = [0, 64], sizes = [8, 32], strides = [1, 1]} : vector<8x128xf32> to vector<8x32xf32>
    %282 = vector.extract_strided_slice %278 {offsets = [0, 96], sizes = [8, 32], strides = [1, 1]} : vector<8x128xf32> to vector<8x32xf32>
    %283 = arith.mulf %280, %241 : vector<8x32xf32>
    %284 = arith.mulf %279, %282 : vector<8x32xf32>
    %285 = arith.addf %283, %284 : vector<8x32xf32>
    %286 = math.tanh %285 : vector<8x32xf32>
    %287 = arith.mulf %281, %286 : vector<8x32xf32>
    %288 = tpu.concatenate %287, %264 in 1 : vector<8x32xf32>, vector<8x32xf32> -> vector<8x64xf32>
    %289 = arith.truncf %288 : vector<8x64xf32> to vector<8x64xbf16>
    %cst_51 = arith.constant dense<0.000000e+00> : vector<8x128xf32>
    %290 = tpu.matmul %289, %8, %cst_51 {dimension_numbers = #tpu.dot_dimension_numbers<[1], [0], [0], [1], [0, 0, 1, 1], [], []>} : vector<8x64xbf16>, vector<64x128xbf16>, vector<8x128xf32> -> vector<8x128xf32>
    %291 = vector.broadcast %9 : vector<1x128xf32> to vector<8x128xf32>
    %292 = arith.addf %290, %291 : vector<8x128xf32>
    %293 = arith.negf %292 : vector<8x128xf32>
    %294 = math.exp %293 : vector<8x128xf32>
    %cst_52 = arith.constant 1.000000e+00 : f32
    %295 = vector.broadcast %cst_52 : f32 to vector<8x128xf32>
    %296 = arith.addf %295, %294 : vector<8x128xf32>
    %297 = arith.divf %295, %296 : vector<8x128xf32>
    %298 = math.tanh %292 : vector<8x128xf32>
    %299 = arith.select %12, %297, %298 : vector<8x128xi1>, vector<8x128xf32>
    %300 = vector.extract_strided_slice %299 {offsets = [0, 0], sizes = [8, 32], strides = [1, 1]} : vector<8x128xf32> to vector<8x32xf32>
    %301 = vector.extract_strided_slice %299 {offsets = [0, 32], sizes = [8, 32], strides = [1, 1]} : vector<8x128xf32> to vector<8x32xf32>
    %302 = vector.extract_strided_slice %299 {offsets = [0, 64], sizes = [8, 32], strides = [1, 1]} : vector<8x128xf32> to vector<8x32xf32>
    %303 = vector.extract_strided_slice %299 {offsets = [0, 96], sizes = [8, 32], strides = [1, 1]} : vector<8x128xf32> to vector<8x32xf32>
    %304 = arith.mulf %301, %262 : vector<8x32xf32>
    %305 = arith.mulf %300, %303 : vector<8x32xf32>
    %306 = arith.addf %304, %305 : vector<8x32xf32>
    %307 = math.tanh %306 : vector<8x32xf32>
    %308 = arith.mulf %302, %307 : vector<8x32xf32>
    %c7_i32 = arith.constant 7 : i32
    %c8_i32_53 = arith.constant 8 : i32
    %309 = arith.muli %c7_i32, %c8_i32_53 : i32
    %310 = tpu.assume_multiple %309, 8 : i32
    %311 = arith.index_cast %310 : i32 to index
    %c0_54 = arith.constant 0 : index
    %312 = vector.load %arg9[%311, %c0_54] : memref<64x128xf32, #tpu.memory_space<vmem>>, vector<8x128xf32>
    %313 = arith.truncf %287 : vector<8x32xf32> to vector<8x32xbf16>
    %cst_55 = arith.constant dense<0.000000e+00> : vector<8x128xf32>
    %314 = tpu.matmul %313, %7, %cst_55 {dimension_numbers = #tpu.dot_dimension_numbers<[1], [0], [0], [1], [0, 0, 1, 1], [], []>} : vector<8x32xbf16>, vector<32x128xbf16>, vector<8x128xf32> -> vector<8x128xf32>
    %315 = arith.addf %312, %314 : vector<8x128xf32>
    %316 = arith.negf %315 : vector<8x128xf32>
    %317 = math.exp %316 : vector<8x128xf32>
    %cst_56 = arith.constant 1.000000e+00 : f32
    %318 = vector.broadcast %cst_56 : f32 to vector<8x128xf32>
    %319 = arith.addf %318, %317 : vector<8x128xf32>
    %320 = arith.divf %318, %319 : vector<8x128xf32>
    %321 = math.tanh %315 : vector<8x128xf32>
    %322 = arith.select %12, %320, %321 : vector<8x128xi1>, vector<8x128xf32>
    %323 = vector.extract_strided_slice %322 {offsets = [0, 0], sizes = [8, 32], strides = [1, 1]} : vector<8x128xf32> to vector<8x32xf32>
    %324 = vector.extract_strided_slice %322 {offsets = [0, 32], sizes = [8, 32], strides = [1, 1]} : vector<8x128xf32> to vector<8x32xf32>
    %325 = vector.extract_strided_slice %322 {offsets = [0, 64], sizes = [8, 32], strides = [1, 1]} : vector<8x128xf32> to vector<8x32xf32>
    %326 = vector.extract_strided_slice %322 {offsets = [0, 96], sizes = [8, 32], strides = [1, 1]} : vector<8x128xf32> to vector<8x32xf32>
    %327 = arith.mulf %324, %285 : vector<8x32xf32>
    %328 = arith.mulf %323, %326 : vector<8x32xf32>
    %329 = arith.addf %327, %328 : vector<8x32xf32>
    %330 = math.tanh %329 : vector<8x32xf32>
    %331 = arith.mulf %325, %330 : vector<8x32xf32>
    %332 = tpu.concatenate %331, %308 in 1 : vector<8x32xf32>, vector<8x32xf32> -> vector<8x64xf32>
    %333 = arith.truncf %332 : vector<8x64xf32> to vector<8x64xbf16>
    %cst_57 = arith.constant dense<0.000000e+00> : vector<8x128xf32>
    %334 = tpu.matmul %333, %8, %cst_57 {dimension_numbers = #tpu.dot_dimension_numbers<[1], [0], [0], [1], [0, 0, 1, 1], [], []>} : vector<8x64xbf16>, vector<64x128xbf16>, vector<8x128xf32> -> vector<8x128xf32>
    %335 = vector.broadcast %9 : vector<1x128xf32> to vector<8x128xf32>
    %336 = arith.addf %334, %335 : vector<8x128xf32>
    %337 = arith.negf %336 : vector<8x128xf32>
    %338 = math.exp %337 : vector<8x128xf32>
    %cst_58 = arith.constant 1.000000e+00 : f32
    %339 = vector.broadcast %cst_58 : f32 to vector<8x128xf32>
    %340 = arith.addf %339, %338 : vector<8x128xf32>
    %341 = arith.divf %339, %340 : vector<8x128xf32>
    %342 = math.tanh %336 : vector<8x128xf32>
    %343 = arith.select %12, %341, %342 : vector<8x128xi1>, vector<8x128xf32>
    %344 = vector.extract_strided_slice %343 {offsets = [0, 0], sizes = [8, 32], strides = [1, 1]} : vector<8x128xf32> to vector<8x32xf32>
    %345 = vector.extract_strided_slice %343 {offsets = [0, 32], sizes = [8, 32], strides = [1, 1]} : vector<8x128xf32> to vector<8x32xf32>
    %346 = vector.extract_strided_slice %343 {offsets = [0, 64], sizes = [8, 32], strides = [1, 1]} : vector<8x128xf32> to vector<8x32xf32>
    %347 = vector.extract_strided_slice %343 {offsets = [0, 96], sizes = [8, 32], strides = [1, 1]} : vector<8x128xf32> to vector<8x32xf32>
    %348 = arith.mulf %345, %306 : vector<8x32xf32>
    %349 = arith.mulf %344, %347 : vector<8x32xf32>
    %350 = arith.addf %348, %349 : vector<8x32xf32>
    %351 = math.tanh %350 : vector<8x32xf32>
    %352 = arith.mulf %346, %351 : vector<8x32xf32>
    %c7_i32_59 = arith.constant 7 : i32
    %c0_60 = arith.constant 0 : index
    %c0_61 = arith.constant 0 : index
    %353 = vector.load %arg6[%c0_60, %c0_61] : memref<1x32xf32, #tpu.memory_space<vmem>>, vector<1x32xf32>
    %354 = vector.broadcast %353 : vector<1x32xf32> to vector<8x32xf32>
    %355 = arith.mulf %352, %354 : vector<8x32xf32>
    %cst_62 = arith.constant dense<0.000000e+00> : vector<8xf32>
    %356 = vector.multi_reduction <add>, %355, %cst_62 [1] : vector<8x32xf32> to vector<8xf32>
    %357 = vector.shape_cast %356 : vector<8xf32> to vector<8x1xf32>
    %c0_63 = arith.constant 0 : index
    %358 = memref.load %arg7[%c0_63] : memref<1xf32, #tpu.memory_space<smem>>
    %359 = vector.broadcast %358 : f32 to vector<8x1xf32>
    %360 = arith.addf %357, %359 : vector<8x1xf32>
    %c0_64 = arith.constant 0 : index
    %c0_65 = arith.constant 0 : index
    %361 = vector.load %arg8[%c0_64, %c0_65] : memref<8x1xf32, #tpu.memory_space<vmem>>, vector<8x1xf32>
    tpu.vector_store %arg8[%c0_64, %c0_65], %360 {strides = array<i32>} : memref<8x1xf32, #tpu.memory_space<vmem>>, vector<8x1xf32>,
    return
  }
}

</mosaic_0001>

<llo_original>
// kernel: tpu_custom_call.1
$region0: #{tpu_custom_call.1}
  #allocation0 [shape = 'u32[]', space=smem, size = 0x4, offset = 0x4, fixed_abs, tag = 'smem constant byte address 0x4 - core index']
  #allocation1 [shape = 'u32[144,128]{1,0:T(1,128)}', space=vmem, size = 0x12000, scoped, tag = 'internal scratch']
  #allocation2 [shape = 'f32[64,128]{1,0:T(8,128)}', space=vmem, size = 0x8000, scoped, tag = 'scratch operand']
  #allocation3 [shape = 'f32[1]{0:T(128)S(6)}', space=smem, size = 0x200, scoped, tag = 'scoped memory for tpu_custom_call.1']
  %s0 = inlined_call_operand.vmem [shape: bf16[64,8], index: 0, kind: input, shape index: {}]
  %s1 = inlined_call_operand.vmem [shape: bf16[8,128], index: 1, kind: input, shape index: {}]
  %s2 = inlined_call_operand.hbm [shape: bf16[32,128], index: 2, kind: input, shape index: {}]
  %s3 = inlined_call_operand.vmem [shape: f32[1,128], index: 3, kind: input, shape index: {}]
  %s4 = inlined_call_operand.vmem [shape: bf16[64,128], index: 4, kind: input, shape index: {}]
  %s5 = inlined_call_operand.vmem [shape: f32[1,128], index: 5, kind: input, shape index: {}]
  %s6 = inlined_call_operand.vmem [shape: f32[1,32], index: 6, kind: input, shape index: {}]
  %s7 = inlined_call_operand.<no memory space> [shape: f32[1], index: 7, kind: input, shape index: {}]
  %s8 = inlined_call_operand.vmem [shape: f32[8,1], index: 8, kind: output, shape index: {}]
  %s9 = sld [smem:[#allocation0]]
  $region46: #{tpu_custom_call.1} parent=0
    _
  %s11 = ssub.s32 1, %s9
  %s12 = scalar_select 0, %s11, %s9
  %13 = sst [smem:[#allocation3]] %s7
  $region1: #{tpu_custom_call.1} parent=0
    #allocation4 [shape = 'u8[8192]{0}', space=vmem, size = 0x2000, scoped, tag = 'input window, operand 2, single buffered']
    #allocation5 [shape = 's32[1]{0}', space=sflag, size = 0x4, scoped, tag = 'scoped memory for tpu_custom_call.1']
    %14 = vsyncpa [#allocation5], 0
    // Predicated region
    $region2: #{tpu_custom_call.1} parent=1 // pred_check
      _
    $region3: #{tpu_custom_call.1} parent=1 // pred_check_branch
      %16 = sbr.rel (0) target = $region5
    $region4: #{tpu_custom_call.1} parent=1 // pred_region
      _
    $region5: #{tpu_custom_call.1} parent=1 // pred_fallthru
      _
    // Predicated region
    $region6: #{tpu_custom_call.1} parent=1 // pred_check
      _
    $region7: #{tpu_custom_call.1} parent=1 // pred_check_branch
      %18 = sbr.rel (0) target = $region9
    $region8: #{tpu_custom_call.1} parent=1 // pred_region
      _
    $region9: #{tpu_custom_call.1} parent=1 // pred_fallthru
      _
    // Predicated region
    $region10: #{tpu_custom_call.1} parent=1 // pred_check
      _
    $region11: #{tpu_custom_call.1} parent=1 // pred_check_branch
      %20 = sbr.rel (0) target = $region13
    $region12: #{tpu_custom_call.1} parent=1 // pred_region
      %s22 = ssub.s32 256, 256
      %23 = vsyncadd [#allocation5], %s22
      %s24 = sshll.u32 [#allocation4], 4
      %s25 = int_to_ptr.vmem [resolvable:$true] %s24
      %30 = dma.hbm_to_vmem [thread:$0]  %s2, 256, %s25, [#allocation5], 64, 64, 4
    $region13: #{tpu_custom_call.1} parent=1 // pred_fallthru
      _
    // Predicated region
    $region14: #{tpu_custom_call.1} parent=1 // pred_check
      _
    $region15: #{tpu_custom_call.1} parent=1 // pred_check_branch
      %32 = sbr.rel (0) target = $region17
    $region16: #{tpu_custom_call.1} parent=1 // pred_region
      _
    $region17: #{tpu_custom_call.1} parent=1 // pred_fallthru
      _
    // Predicated region
    $region18: #{tpu_custom_call.1} parent=1 // pred_check
      _
    $region19: #{tpu_custom_call.1} parent=1 // pred_check_branch
      %34 = sbr.rel (0) target = $region21
    $region20: #{tpu_custom_call.1} parent=1 // pred_region
      _
    $region21: #{tpu_custom_call.1} parent=1 // pred_fallthru
      _
    // Predicated region
    $region22: #{tpu_custom_call.1} parent=1 // pred_check
      _
    $region23: #{tpu_custom_call.1} parent=1 // pred_check_branch
      %36 = sbr.rel (0) target = $region25
    $region24: #{tpu_custom_call.1} parent=1 // pred_region
      _
    $region25: #{tpu_custom_call.1} parent=1 // pred_fallthru
      _
    // Predicated region
    $region26: #{tpu_custom_call.1} parent=1 // pred_check
      _
    $region27: #{tpu_custom_call.1} parent=1 // pred_check_branch
      %38 = sbr.rel (0) target = $region29
    $region28: #{tpu_custom_call.1} parent=1 // pred_region
      _
    $region29: #{tpu_custom_call.1} parent=1 // pred_fallthru
      _
    // Predicated region
    $region30: #{tpu_custom_call.1} parent=1 // pred_check
      _
    $region31: #{tpu_custom_call.1} parent=1 // pred_check_branch
      %40 = sbr.rel (0) target = $region33
    $region32: #{tpu_custom_call.1} parent=1 // pred_region
      _
    $region33: #{tpu_custom_call.1} parent=1 // pred_fallthru
      _
    // Predicated region
    $region34: #{tpu_custom_call.1} parent=1 // pred_check
      _
    $region35: #{tpu_custom_call.1} parent=1 // pred_check_branch
      %42 = sbr.rel (0) target = $region37
    $region36: #{tpu_custom_call.1} parent=1 // pred_region
      %43 = dma.done [#allocation5], 256
    $region37: #{tpu_custom_call.1} parent=1 // pred_fallthru
      _
    %v45 = vld [vmem:[%s0] sm:$0xf]
    %v46 = vld [vmem:[%s0 + $0x4] sm:$0xf]
    %v47 = vld [vmem:[%s0 + $0x8] sm:$0xf]
    %v48 = vld [vmem:[%s0 + $0xc] sm:$0xf]
    %v49 = vld [vmem:[%s0 + $0x10] sm:$0xf]
    %v50 = vld [vmem:[%s0 + $0x14] sm:$0xf]
    %v51 = vld [vmem:[%s0 + $0x18] sm:$0xf]
    %v52 = vld [vmem:[%s0 + $0x1c] sm:$0xf]
    %v53 = vld [vmem:[%s1] sm:$0xf]
    %v54 = vld [vmem:[%s3] sm:$0x1]
    %v56 = vlaneseq
    %v57 = vshrl.u32 %v56, 7
    %v58 = vsub.s32 0, %v57
    %v59 = vrot.slane %v54, %v58
    %v69 = vunpack.c.l.b16 %v45
    %v70 = vunpack.c.l.b16 %v46
    %v71 = vunpack.c.l.b16 %v47
    %v72 = vunpack.c.l.b16 %v48
    %v73 = vunpack.c.l.b16 %v49
    %v74 = vunpack.c.l.b16 %v50
    %v75 = vunpack.c.l.b16 %v51
    %v76 = vunpack.c.l.b16 %v52
    %v77 = vpack.c.b16 %v70, %v69
    %v78 = vpack.c.b16 %v72, %v71
    %v79 = vpack.c.b16 %v74, %v73
    %v80 = vpack.c.b16 %v76, %v75
    %vm81 = vcmask 64512
    %v83 = vsel %vm81, %v77, 0
    %v86 = vsel %vm81, %v78, 0
    %v89 = vsel %vm81, %v79, 0
    %v92 = vsel %vm81, %v80, 0
    %vm94 = vcmask 1043456
    %v96 = vsel %vm94, %v53, 0
    %98 = vmatprep.subr.bf16.mxu0 0
    %99 = vmatpush1.bf16.msra.mxu0 0
    %100 = vmatprep.subr.bf16.mxu0 0
    %101 = vmatpush1.bf16.msra.mxu0 0
    %102 = vmatprep.subr.bf16.mxu0 0
    %103 = vmatpush1.bf16.msra.mxu0 0
    %104 = vmatprep.subr.bf16.mxu0 0
    %105 = vmatpush1.bf16.msra.mxu0 0
    %106 = vmatprep.subr.bf16.mxu0 0
    %107 = vmatpush1.bf16.msra.mxu0 0
    %108 = vmatprep.subr.bf16.mxu0 0
    %109 = vmatpush1.bf16.msra.mxu0 0
    %110 = vmatprep.subr.bf16.mxu0 0
    %111 = vmatpush1.bf16.msra.mxu0 0
    %112 = vmatprep.subr.bf16.mxu0 0
    %113 = vmatpush1.bf16.msra.mxu0 %v96
    %114 = vmatprep.subr.bf16.mxu0 0
    %115 = vmatpush2.bf16.msra.mxu0 0
    %116 = vmatprep.subr.bf16.mxu0 0
    %117 = vmatpush2.bf16.msra.mxu0 0
    %118 = vmatprep.subr.bf16.mxu0 0
    %119 = vmatpush2.bf16.msra.mxu0 0
    %120 = vmatprep.subr.bf16.mxu0 0
    %121 = vmatpush2.bf16.msra.mxu0 0
    %122 = vmatprep.subr.bf16.mxu0 0
    %123 = vmatpush2.bf16.msra.mxu0 0
    %124 = vmatprep.subr.bf16.mxu0 0
    %125 = vmatpush2.bf16.msra.mxu0 0
    %126 = vmatprep.subr.bf16.mxu0 0
    %127 = vmatpush2.bf16.msra.mxu0 0
    %128 = vmatprep.subr.bf16.mxu0 0
    %129 = vmatpush2.bf16.msra.mxu0 0
    %130 = vmatprep.mubr.bf16.mxu0 0
    %131 = vmatmul.mubr.bf16.gmra.mxu0 %v83
    %v132 = vpop.f32.mrf.mxu0
    %v133 = vadd.f32 %v59, %v132
    %v134 = vpop.f32.mrf.mxu0
    %v135 = vpop.f32.mrf.mxu0
    %v136 = vadd.f32 %v59, %v135
    %v137 = vpop.f32.mrf.mxu0
    %138 = vmatprep.mubr.bf16.mxu0 0
    %139 = vmatmul.mubr.bf16.gmra.mxu0 %v86
    %v140 = vpop.f32.mrf.mxu0
    %v141 = vadd.f32 %v59, %v140
    %v142 = vpop.f32.mrf.mxu0
    %v143 = vpop.f32.mrf.mxu0
    %v144 = vadd.f32 %v59, %v143
    %v145 = vpop.f32.mrf.mxu0
    %146 = vmatprep.mubr.bf16.mxu0 0
    %147 = vmatmul.mubr.bf16.gmra.mxu0 %v89
    %v148 = vpop.f32.mrf.mxu0
    %v149 = vadd.f32 %v59, %v148
    %v150 = vpop.f32.mrf.mxu0
    %v151 = vpop.f32.mrf.mxu0
    %v152 = vadd.f32 %v59, %v151
    %v153 = vpop.f32.mrf.mxu0
    %154 = vmatprep.mubr.bf16.mxu0 0
    %155 = vmatmul.mubr.bf16.gmra.mxu0 %v92
    %v156 = vpop.f32.mrf.mxu0
    %v157 = vadd.f32 %v59, %v156
    %v158 = vpop.f32.mrf.mxu0
    %v159 = vpop.f32.mrf.mxu0
    %v160 = vadd.f32 %v59, %v159
    %v161 = vpop.f32.mrf.mxu0
    %162 = vdwg.mxu0
    %163 = vst [vmem:[#allocation2] sm:$0xff] %v133
    %164 = vst [vmem:[#allocation2 + $0x8] sm:$0xff] %v136
    %165 = vst [vmem:[#allocation2 + $0x10] sm:$0xff] %v141
    %166 = vst [vmem:[#allocation2 + $0x18] sm:$0xff] %v144
    %167 = vst [vmem:[#allocation2 + $0x20] sm:$0xff] %v149
    %168 = vst [vmem:[#allocation2 + $0x28] sm:$0xff] %v152
    %169 = vst [vmem:[#allocation2 + $0x30] sm:$0xff] %v157
    %170 = vst [vmem:[#allocation2 + $0x38] sm:$0xff] %v160
    %v171 = vld [vmem:[#allocation4] sm:$0xf]
    %v172 = vld [vmem:[#allocation4 + $0x4] sm:$0xf]
    %v173 = vld [vmem:[#allocation4 + $0x8] sm:$0xf]
    %v174 = vld [vmem:[#allocation4 + $0xc] sm:$0xf]
    %v175 = vld [vmem:[%s4] sm:$0xf]
    %v176 = vld [vmem:[%s4 + $0x4] sm:$0xf]
    %v177 = vld [vmem:[%s4 + $0x8] sm:$0xf]
    %v178 = vld [vmem:[%s4 + $0xc] sm:$0xf]
    %v179 = vld [vmem:[%s4 + $0x10] sm:$0xf]
    %v180 = vld [vmem:[%s4 + $0x14] sm:$0xf]
    %v181 = vld [vmem:[%s4 + $0x18] sm:$0xf]
    %v182 = vld [vmem:[%s4 + $0x1c] sm:$0xf]
    %v183 = vld [vmem:[%s5] sm:$0x1]
    %v184 = vlaneseq
    %v185 = vand.u32 %v184, 127
    %vm186 = vcmp.lt.s32.totalorder %v185, 96
    %v187 = vld [vmem:[#allocation2] sm:$0xff]
    %v188 = vxor.u32 %v187, 2147483648
    %v189 = vmul.f32 %v188, 1.442695
    %v190 = vpow.pop %v189
    %v191 = vadd.f32 %v190, 1.0
    %v192 = vrcp.pop %v191
    %v193 = vmul.f32 1.0, %v192
    %v194 = vtanh.pop %v187
    %v195 = vsel %vm186, %v193, %v194
    %197 = vrot.lane.b32.xlu0 %v195, 32
    %v198 = vpop.permute.xlu0 %197
    %v200 = vmul.f32 %v195, %v198
    %v201 = vtanh.pop %v200
    %203 = vrot.lane.b32.xlu0 %v201, 64
    %v204 = vpop.permute.xlu0 %203
    %v206 = vmul.f32 %v195, %v204
    %v207 = vpack.c.bf16 %v206, %v206
    %v209 = vlaneseq
    %v210 = vshrl.u32 %v209, 7
    %v211 = vsub.s32 0, %v210
    %v212 = vrot.slane %v183, %v211
    %215 = vrot.lane.b32.xlu0 %v207, 64
    %v216 = vpop.permute.xlu0 %215
    %v221 = vunpack.c.l.b16 %v175
    %v222 = vunpack.c.l.b16 %v176
    %v223 = vunpack.c.l.b16 %v177
    %v224 = vunpack.c.l.b16 %v178
    %v225 = vpack.c.b16 %v222, %v221
    %v226 = vpack.c.b16 %v224, %v223
    %vm229 = vcmask 261120
    %v231 = vsel %vm229, %v216, 0
    %233 = vmatprep.subr.bf16.mxu0 0
    %234 = vmatpush1.bf16.msra.mxu0 0
    %235 = vmatprep.subr.bf16.mxu0 0
    %236 = vmatpush1.bf16.msra.mxu0 0
    %237 = vmatprep.subr.bf16.mxu0 0
    %238 = vmatpush1.bf16.msra.mxu0 0
    %239 = vmatprep.subr.bf16.mxu0 0
    %240 = vmatpush1.bf16.msra.mxu0 0
    %241 = vmatprep.subr.bf16.mxu0 0
    %242 = vmatpush1.bf16.msra.mxu0 0
    %243 = vmatprep.subr.bf16.mxu0 0
    %244 = vmatpush1.bf16.msra.mxu0 0
    %245 = vmatprep.subr.bf16.mxu0 0
    %246 = vmatpush1.bf16.msra.mxu0 %v226
    %247 = vmatprep.subr.bf16.mxu0 0
    %248 = vmatpush1.bf16.msra.mxu0 %v225
    %249 = vmatprep.subr.bf16.mxu0 0
    %250 = vmatpush2.bf16.msra.mxu0 0
    %251 = vmatprep.subr.bf16.mxu0 0
    %252 = vmatpush2.bf16.msra.mxu0 0
    %253 = vmatprep.subr.bf16.mxu0 0
    %254 = vmatpush2.bf16.msra.mxu0 0
    %255 = vmatprep.subr.bf16.mxu0 0
    %256 = vmatpush2.bf16.msra.mxu0 0
    %257 = vmatprep.subr.bf16.mxu0 0
    %258 = vmatpush2.bf16.msra.mxu0 0
    %259 = vmatprep.subr.bf16.mxu0 0
    %260 = vmatpush2.bf16.msra.mxu0 0
    %261 = vmatprep.subr.bf16.mxu0 0
    %262 = vmatpush2.bf16.msra.mxu0 0
    %263 = vmatprep.subr.bf16.mxu0 0
    %264 = vmatpush2.bf16.msra.mxu0 0
    %265 = vmatprep.mubr.bf16.mxu0 0
    %266 = vmatmul.mubr.bf16.gmra.mxu0 %v231
    %v267 = vpop.f32.mrf.mxu0
    %v268 = vadd.f32 %v212, %v267
    %v269 = vpop.f32.mrf.mxu0
    %v270 = vpop.f32.mrf.mxu0
    %v271 = vpop.f32.mrf.mxu0
    %272 = vdwg.mxu0
    %v273 = vxor.u32 %v268, 2147483648
    %v274 = vmul.f32 %v273, 1.442695
    %v275 = vpow.pop %v274
    %v276 = vadd.f32 %v275, 1.0
    %v277 = vrcp.pop %v276
    %v278 = vmul.f32 1.0, %v277
    %v279 = vtanh.pop %v268
    %v280 = vsel %vm186, %v278, %v279
    %282 = vrot.lane.b32.xlu0 %v280, 32
    %v283 = vpop.permute.xlu0 %282
    %v285 = vmul.f32 %v280, %v283
    %v286 = vtanh.pop %v285
    %288 = vrot.lane.b32.xlu0 %v286, 64
    %v289 = vpop.permute.xlu0 %288
    %v291 = vmul.f32 %v280, %v289
    %s292 = scalar_lea.vmem [#allocation2], 8
    %v293 = vld [vmem:[%s292] sm:$0xff]
    %v298 = vunpack.c.l.b16 %v171
    %v299 = vunpack.c.l.b16 %v172
    %v300 = vunpack.c.l.b16 %v173
    %v301 = vunpack.c.l.b16 %v174
    %v302 = vpack.c.b16 %v299, %v298
    %v303 = vpack.c.b16 %v301, %v300
    %306 = vmatprep.subr.bf16.mxu0 0
    %307 = vmatpush1.bf16.msra.mxu0 0
    %308 = vmatprep.subr.bf16.mxu0 0
    %309 = vmatpush1.bf16.msra.mxu0 0
    %310 = vmatprep.subr.bf16.mxu0 0
    %311 = vmatpush1.bf16.msra.mxu0 0
    %312 = vmatprep.subr.bf16.mxu0 0
    %313 = vmatpush1.bf16.msra.mxu0 0
    %314 = vmatprep.subr.bf16.mxu0 0
    %315 = vmatpush1.bf16.msra.mxu0 0
    %316 = vmatprep.subr.bf16.mxu0 0
    %317 = vmatpush1.bf16.msra.mxu0 0
    %318 = vmatprep.subr.bf16.mxu0 0
    %319 = vmatpush1.bf16.msra.mxu0 %v303
    %320 = vmatprep.subr.bf16.mxu0 0
    %321 = vmatpush1.bf16.msra.mxu0 %v302
    %322 = vmatprep.subr.bf16.mxu0 0
    %323 = vmatpush2.bf16.msra.mxu0 0
    %324 = vmatprep.subr.bf16.mxu0 0
    %325 = vmatpush2.bf16.msra.mxu0 0
    %326 = vmatprep.subr.bf16.mxu0 0
    %327 = vmatpush2.bf16.msra.mxu0 0
    %328 = vmatprep.subr.bf16.mxu0 0
    %329 = vmatpush2.bf16.msra.mxu0 0
    %330 = vmatprep.subr.bf16.mxu0 0
    %331 = vmatpush2.bf16.msra.mxu0 0
    %332 = vmatprep.subr.bf16.mxu0 0
    %333 = vmatpush2.bf16.msra.mxu0 0
    %334 = vmatprep.subr.bf16.mxu0 0
    %335 = vmatpush2.bf16.msra.mxu0 0
    %336 = vmatprep.subr.bf16.mxu0 0
    %337 = vmatpush2.bf16.msra.mxu0 0
    %338 = vmatprep.mubr.bf16.mxu0 0
    %339 = vmatmul.mubr.bf16.gmra.mxu0 %v231
    %v340 = vpop.f32.mrf.mxu0
    %v341 = vadd.f32 0.0, %v340
    %v342 = vpop.f32.mrf.mxu0
    %v343 = vpop.f32.mrf.mxu0
    %v344 = vpop.f32.mrf.mxu0
    %345 = vdwg.mxu0
    %v346 = vadd.f32 %v293, %v341
    %v347 = vxor.u32 %v346, 2147483648
    %v348 = vmul.f32 %v347, 1.442695
    %v349 = vpow.pop %v348
    %v350 = vadd.f32 %v349, 1.0
    %v351 = vrcp.pop %v350
    %v352 = vmul.f32 1.0, %v351
    %v353 = vtanh.pop %v346
    %v354 = vsel %vm186, %v352, %v353
    %356 = vrot.lane.b32.xlu0 %v200, 32
    %v357 = vpop.permute.xlu0 %356
    %v359 = vmul.f32 %v354, %v357
    %361 = vrot.lane.b32.xlu0 %v354, 32
    %v362 = vpop.permute.xlu0 %361
    %v364 = vmul.f32 %v354, %v362
    %366 = vrot.lane.b32.xlu0 %v364, 32
    %v367 = vpop.permute.xlu0 %366
    %v369 = vadd.f32 %v359, %v367
    %v370 = vtanh.pop %v369
    %372 = vrot.lane.b32.xlu0 %v370, 32
    %v373 = vpop.permute.xlu0 %372
    %v375 = vmul.f32 %v354, %v373
    %377 = vrot.lane.b32.xlu0 %v375, 64
    %v378 = vpop.permute.xlu0 %377
    %381 = vrot.lane.b32.xlu0 %v291, 96
    %v382 = vpop.permute.xlu0 %381
    %v384 = vsel %vm229, %v378, %v382
    %v385 = vpack.c.bf16 %v384, %v384
    %v390 = vunpack.c.l.b16 %v179
    %v391 = vunpack.c.l.b16 %v180
    %v392 = vunpack.c.l.b16 %v181
    %v393 = vunpack.c.l.b16 %v182
    %v394 = vpack.c.b16 %v391, %v390
    %v395 = vpack.c.b16 %v393, %v392
    %vm398 = vcmask 523264
    %v400 = vsel %vm398, %v385, 0
    %402 = vmatprep.subr.bf16.mxu0 0
    %403 = vmatpush1.bf16.msra.mxu0 0
    %404 = vmatprep.subr.bf16.mxu0 0
    %405 = vmatpush1.bf16.msra.mxu0 0
    %406 = vmatprep.subr.bf16.mxu0 0
    %407 = vmatpush1.bf16.msra.mxu0 0
    %408 = vmatprep.subr.bf16.mxu0 0
    %409 = vmatpush1.bf16.msra.mxu0 0
    %410 = vmatprep.subr.bf16.mxu0 0
    %411 = vmatpush1.bf16.msra.mxu0 %v395
    %412 = vmatprep.subr.bf16.mxu0 0
    %413 = vmatpush1.bf16.msra.mxu0 %v394
    %414 = vmatprep.subr.bf16.mxu0 0
    %415 = vmatpush1.bf16.msra.mxu0 %v226
    %416 = vmatprep.subr.bf16.mxu0 0
    %417 = vmatpush1.bf16.msra.mxu0 %v225
    %418 = vmatprep.subr.bf16.mxu0 0
    %419 = vmatpush2.bf16.msra.mxu0 0
    %420 = vmatprep.subr.bf16.mxu0 0
    %421 = vmatpush2.bf16.msra.mxu0 0
    %422 = vmatprep.subr.bf16.mxu0 0
    %423 = vmatpush2.bf16.msra.mxu0 0
    %424 = vmatprep.subr.bf16.mxu0 0
    %425 = vmatpush2.bf16.msra.mxu0 0
    %426 = vmatprep.subr.bf16.mxu0 0
    %427 = vmatpush2.bf16.msra.mxu0 0
    %428 = vmatprep.subr.bf16.mxu0 0
    %429 = vmatpush2.bf16.msra.mxu0 0
    %430 = vmatprep.subr.bf16.mxu0 0
    %431 = vmatpush2.bf16.msra.mxu0 0
    %432 = vmatprep.subr.bf16.mxu0 0
    %433 = vmatpush2.bf16.msra.mxu0 0
    %434 = vmatprep.mubr.bf16.mxu0 0
    %435 = vmatmul.mubr.bf16.gmra.mxu0 %v400
    %v436 = vpop.f32.mrf.mxu0
    %v437 = vadd.f32 %v212, %v436
    %v438 = vpop.f32.mrf.mxu0
    %v439 = vpop.f32.mrf.mxu0
    %v440 = vpop.f32.mrf.mxu0
    %441 = vdwg.mxu0
    %v442 = vxor.u32 %v437, 2147483648
    %v443 = vmul.f32 %v442, 1.442695
    %v444 = vpow.pop %v443
    %v445 = vadd.f32 %v444, 1.0
    %v446 = vrcp.pop %v445
    %v447 = vmul.f32 1.0, %v446
    %v448 = vtanh.pop %v437
    %v449 = vsel %vm186, %v447, %v448
    %451 = vrot.lane.b32.xlu0 %v285, 32
    %v452 = vpop.permute.xlu0 %451
    %v454 = vmul.f32 %v449, %v452
    %456 = vrot.lane.b32.xlu0 %v449, 32
    %v457 = vpop.permute.xlu0 %456
    %v459 = vmul.f32 %v449, %v457
    %461 = vrot.lane.b32.xlu0 %v459, 32
    %v462 = vpop.permute.xlu0 %461
    %v464 = vadd.f32 %v454, %v462
    %v465 = vtanh.pop %v464
    %467 = vrot.lane.b32.xlu0 %v465, 32
    %v468 = vpop.permute.xlu0 %467
    %v470 = vmul.f32 %v449, %v468
    %s471 = scalar_lea.vmem [#allocation2], 16
    %v472 = vld [vmem:[%s471] sm:$0xff]
    %v473 = vpack.c.bf16 %v375, %v375
    %475 = vrot.lane.b32.xlu0 %v473, 64
    %v476 = vpop.permute.xlu0 %475
    %v478 = vsel %vm229, %v476, 0
    %480 = vmatprep.subr.bf16.mxu0 0
    %481 = vmatpush1.bf16.msra.mxu0 0
    %482 = vmatprep.subr.bf16.mxu0 0
    %483 = vmatpush1.bf16.msra.mxu0 0
    %484 = vmatprep.subr.bf16.mxu0 0
    %485 = vmatpush1.bf16.msra.mxu0 0
    %486 = vmatprep.subr.bf16.mxu0 0
    %487 = vmatpush1.bf16.msra.mxu0 0
    %488 = vmatprep.subr.bf16.mxu0 0
    %489 = vmatpush1.bf16.msra.mxu0 0
    %490 = vmatprep.subr.bf16.mxu0 0
    %491 = vmatpush1.bf16.msra.mxu0 0
    %492 = vmatprep.subr.bf16.mxu0 0
    %493 = vmatpush1.bf16.msra.mxu0 %v303
    %494 = vmatprep.subr.bf16.mxu0 0
    %495 = vmatpush1.bf16.msra.mxu0 %v302
    %496 = vmatprep.subr.bf16.mxu0 0
    %497 = vmatpush2.bf16.msra.mxu0 0
    %498 = vmatprep.subr.bf16.mxu0 0
    %499 = vmatpush2.bf16.msra.mxu0 0
    %500 = vmatprep.subr.bf16.mxu0 0
    %501 = vmatpush2.bf16.msra.mxu0 0
    %502 = vmatprep.subr.bf16.mxu0 0
    %503 = vmatpush2.bf16.msra.mxu0 0
    %504 = vmatprep.subr.bf16.mxu0 0
    %505 = vmatpush2.bf16.msra.mxu0 0
    %506 = vmatprep.subr.bf16.mxu0 0
    %507 = vmatpush2.bf16.msra.mxu0 0
    %508 = vmatprep.subr.bf16.mxu0 0
    %509 = vmatpush2.bf16.msra.mxu0 0
    %510 = vmatprep.subr.bf16.mxu0 0
    %511 = vmatpush2.bf16.msra.mxu0 0
    %512 = vmatprep.mubr.bf16.mxu0 0
    %513 = vmatmul.mubr.bf16.gmra.mxu0 %v478
    %v514 = vpop.f32.mrf.mxu0
    %v515 = vadd.f32 0.0, %v514
    %v516 = vpop.f32.mrf.mxu0
    %v517 = vpop.f32.mrf.mxu0
    %v518 = vpop.f32.mrf.mxu0
    %519 = vdwg.mxu0
    %v520 = vadd.f32 %v472, %v515
    %v521 = vxor.u32 %v520, 2147483648
    %v522 = vmul.f32 %v521, 1.442695
    %v523 = vpow.pop %v522
    %v524 = vadd.f32 %v523, 1.0
    %v525 = vrcp.pop %v524
    %v526 = vmul.f32 1.0, %v525
    %v527 = vtanh.pop %v520
    %v528 = vsel %vm186, %v526, %v527
    %v529 = vmul.f32 %v528, %v369
    %531 = vrot.lane.b32.xlu0 %v528, 32
    %v532 = vpop.permute.xlu0 %531
    %v534 = vmul.f32 %v528, %v532
    %536 = vrot.lane.b32.xlu0 %v534, 32
    %v537 = vpop.permute.xlu0 %536
    %v539 = vadd.f32 %v529, %v537
    %v540 = vtanh.pop %v539
    %542 = vrot.lane.b32.xlu0 %v540, 32
    %v543 = vpop.permute.xlu0 %542
    %v545 = vmul.f32 %v528, %v543
    %547 = vrot.lane.b32.xlu0 %v545, 64
    %v548 = vpop.permute.xlu0 %547
    %551 = vrot.lane.b32.xlu0 %v470, 96
    %v552 = vpop.permute.xlu0 %551
    %v554 = vsel %vm229, %v548, %v552
    %v555 = vpack.c.bf16 %v554, %v554
    %v557 = vsel %vm398, %v555, 0
    %559 = vmatprep.subr.bf16.mxu0 0
    %560 = vmatpush1.bf16.msra.mxu0 0
    %561 = vmatprep.subr.bf16.mxu0 0
    %562 = vmatpush1.bf16.msra.mxu0 0
    %563 = vmatprep.subr.bf16.mxu0 0
    %564 = vmatpush1.bf16.msra.mxu0 0
    %565 = vmatprep.subr.bf16.mxu0 0
    %566 = vmatpush1.bf16.msra.mxu0 0
    %567 = vmatprep.subr.bf16.mxu0 0
    %568 = vmatpush1.bf16.msra.mxu0 %v395
    %569 = vmatprep.subr.bf16.mxu0 0
    %570 = vmatpush1.bf16.msra.mxu0 %v394
    %571 = vmatprep.subr.bf16.mxu0 0
    %572 = vmatpush1.bf16.msra.mxu0 %v226
    %573 = vmatprep.subr.bf16.mxu0 0
    %574 = vmatpush1.bf16.msra.mxu0 %v225
    %575 = vmatprep.subr.bf16.mxu0 0
    %576 = vmatpush2.bf16.msra.mxu0 0
    %577 = vmatprep.subr.bf16.mxu0 0
    %578 = vmatpush2.bf16.msra.mxu0 0
    %579 = vmatprep.subr.bf16.mxu0 0
    %580 = vmatpush2.bf16.msra.mxu0 0
    %581 = vmatprep.subr.bf16.mxu0 0
    %582 = vmatpush2.bf16.msra.mxu0 0
    %583 = vmatprep.subr.bf16.mxu0 0
    %584 = vmatpush2.bf16.msra.mxu0 0
    %585 = vmatprep.subr.bf16.mxu0 0
    %586 = vmatpush2.bf16.msra.mxu0 0
    %587 = vmatprep.subr.bf16.mxu0 0
    %588 = vmatpush2.bf16.msra.mxu0 0
    %589 = vmatprep.subr.bf16.mxu0 0
    %590 = vmatpush2.bf16.msra.mxu0 0
    %591 = vmatprep.mubr.bf16.mxu0 0
    %592 = vmatmul.mubr.bf16.gmra.mxu0 %v557
    %v593 = vpop.f32.mrf.mxu0
    %v594 = vadd.f32 %v212, %v593
    %v595 = vpop.f32.mrf.mxu0
    %v596 = vpop.f32.mrf.mxu0
    %v597 = vpop.f32.mrf.mxu0
    %598 = vdwg.mxu0
    %v599 = vxor.u32 %v594, 2147483648
    %v600 = vmul.f32 %v599, 1.442695
    %v601 = vpow.pop %v600
    %v602 = vadd.f32 %v601, 1.0
    %v603 = vrcp.pop %v602
    %v604 = vmul.f32 1.0, %v603
    %v605 = vtanh.pop %v594
    %v606 = vsel %vm186, %v604, %v605
    %v607 = vmul.f32 %v606, %v464
    %609 = vrot.lane.b32.xlu0 %v606, 32
    %v610 = vpop.permute.xlu0 %609
    %v612 = vmul.f32 %v606, %v610
    %614 = vrot.lane.b32.xlu0 %v612, 32
    %v615 = vpop.permute.xlu0 %614
    %v617 = vadd.f32 %v607, %v615
    %v618 = vtanh.pop %v617
    %620 = vrot.lane.b32.xlu0 %v618, 32
    %v621 = vpop.permute.xlu0 %620
    %v623 = vmul.f32 %v606, %v621
    %s624 = scalar_lea.vmem [#allocation2], 24
    %v625 = vld [vmem:[%s624] sm:$0xff]
    %v626 = vpack.c.bf16 %v545, %v545
    %628 = vrot.lane.b32.xlu0 %v626, 64
    %v629 = vpop.permute.xlu0 %628
    %v631 = vsel %vm229, %v629, 0
    %633 = vmatprep.subr.bf16.mxu0 0
    %634 = vmatpush1.bf16.msra.mxu0 0
    %635 = vmatprep.subr.bf16.mxu0 0
    %636 = vmatpush1.bf16.msra.mxu0 0
    %637 = vmatprep.subr.bf16.mxu0 0
    %638 = vmatpush1.bf16.msra.mxu0 0
    %639 = vmatprep.subr.bf16.mxu0 0
    %640 = vmatpush1.bf16.msra.mxu0 0
    %641 = vmatprep.subr.bf16.mxu0 0
    %642 = vmatpush1.bf16.msra.mxu0 0
    %643 = vmatprep.subr.bf16.mxu0 0
    %644 = vmatpush1.bf16.msra.mxu0 0
    %645 = vmatprep.subr.bf16.mxu0 0
    %646 = vmatpush1.bf16.msra.mxu0 %v303
    %647 = vmatprep.subr.bf16.mxu0 0
    %648 = vmatpush1.bf16.msra.mxu0 %v302
    %649 = vmatprep.subr.bf16.mxu0 0
    %650 = vmatpush2.bf16.msra.mxu0 0
    %651 = vmatprep.subr.bf16.mxu0 0
    %652 = vmatpush2.bf16.msra.mxu0 0
    %653 = vmatprep.subr.bf16.mxu0 0
    %654 = vmatpush2.bf16.msra.mxu0 0
    %655 = vmatprep.subr.bf16.mxu0 0
    %656 = vmatpush2.bf16.msra.mxu0 0
    %657 = vmatprep.subr.bf16.mxu0 0
    %658 = vmatpush2.bf16.msra.mxu0 0
    %659 = vmatprep.subr.bf16.mxu0 0
    %660 = vmatpush2.bf16.msra.mxu0 0
    %661 = vmatprep.subr.bf16.mxu0 0
    %662 = vmatpush2.bf16.msra.mxu0 0
    %663 = vmatprep.subr.bf16.mxu0 0
    %664 = vmatpush2.bf16.msra.mxu0 0
    %665 = vmatprep.mubr.bf16.mxu0 0
    %666 = vmatmul.mubr.bf16.gmra.mxu0 %v631
    %v667 = vpop.f32.mrf.mxu0
    %v668 = vadd.f32 0.0, %v667
    %v669 = vpop.f32.mrf.mxu0
    %v670 = vpop.f32.mrf.mxu0
    %v671 = vpop.f32.mrf.mxu0
    %672 = vdwg.mxu0
    %v673 = vadd.f32 %v625, %v668
    %v674 = vxor.u32 %v673, 2147483648
    %v675 = vmul.f32 %v674, 1.442695
    %v676 = vpow.pop %v675
    %v677 = vadd.f32 %v676, 1.0
    %v678 = vrcp.pop %v677
    %v679 = vmul.f32 1.0, %v678
    %v680 = vtanh.pop %v673
    %v681 = vsel %vm186, %v679, %v680
    %v682 = vmul.f32 %v681, %v539
    %684 = vrot.lane.b32.xlu0 %v681, 32
    %v685 = vpop.permute.xlu0 %684
    %v687 = vmul.f32 %v681, %v685
    %689 = vrot.lane.b32.xlu0 %v687, 32
    %v690 = vpop.permute.xlu0 %689
    %v692 = vadd.f32 %v682, %v690
    %v693 = vtanh.pop %v692
    %695 = vrot.lane.b32.xlu0 %v693, 32
    %v696 = vpop.permute.xlu0 %695
    %v698 = vmul.f32 %v681, %v696
    %700 = vrot.lane.b32.xlu0 %v698, 64
    %v701 = vpop.permute.xlu0 %700
    %704 = vrot.lane.b32.xlu0 %v623, 96
    %v705 = vpop.permute.xlu0 %704
    %v707 = vsel %vm229, %v701, %v705
    %v708 = vpack.c.bf16 %v707, %v707
    %v710 = vsel %vm398, %v708, 0
    %712 = vmatprep.subr.bf16.mxu0 0
    %713 = vmatpush1.bf16.msra.mxu0 0
    %714 = vmatprep.subr.bf16.mxu0 0
    %715 = vmatpush1.bf16.msra.mxu0 0
    %716 = vmatprep.subr.bf16.mxu0 0
    %717 = vmatpush1.bf16.msra.mxu0 0
    %718 = vmatprep.subr.bf16.mxu0 0
    %719 = vmatpush1.bf16.msra.mxu0 0
    %720 = vmatprep.subr.bf16.mxu0 0
    %721 = vmatpush1.bf16.msra.mxu0 %v395
    %722 = vmatprep.subr.bf16.mxu0 0
    %723 = vmatpush1.bf16.msra.mxu0 %v394
    %724 = vmatprep.subr.bf16.mxu0 0
    %725 = vmatpush1.bf16.msra.mxu0 %v226
    %726 = vmatprep.subr.bf16.mxu0 0
    %727 = vmatpush1.bf16.msra.mxu0 %v225
    %728 = vmatprep.subr.bf16.mxu0 0
    %729 = vmatpush2.bf16.msra.mxu0 0
    %730 = vmatprep.subr.bf16.mxu0 0
    %731 = vmatpush2.bf16.msra.mxu0 0
    %732 = vmatprep.subr.bf16.mxu0 0
    %733 = vmatpush2.bf16.msra.mxu0 0
    %734 = vmatprep.subr.bf16.mxu0 0
    %735 = vmatpush2.bf16.msra.mxu0 0
    %736 = vmatprep.subr.bf16.mxu0 0
    %737 = vmatpush2.bf16.msra.mxu0 0
    %738 = vmatprep.subr.bf16.mxu0 0
    %739 = vmatpush2.bf16.msra.mxu0 0
    %740 = vmatprep.subr.bf16.mxu0 0
    %741 = vmatpush2.bf16.msra.mxu0 0
    %742 = vmatprep.subr.bf16.mxu0 0
    %743 = vmatpush2.bf16.msra.mxu0 0
    %744 = vmatprep.mubr.bf16.mxu0 0
    %745 = vmatmul.mubr.bf16.gmra.mxu0 %v710
    %v746 = vpop.f32.mrf.mxu0
    %v747 = vadd.f32 %v212, %v746
    %v748 = vpop.f32.mrf.mxu0
    %v749 = vpop.f32.mrf.mxu0
    %v750 = vpop.f32.mrf.mxu0
    %751 = vdwg.mxu0
    %v752 = vxor.u32 %v747, 2147483648
    %v753 = vmul.f32 %v752, 1.442695
    %v754 = vpow.pop %v753
    %v755 = vadd.f32 %v754, 1.0
    %v756 = vrcp.pop %v755
    %v757 = vmul.f32 1.0, %v756
    %v758 = vtanh.pop %v747
    %v759 = vsel %vm186, %v757, %v758
    %v760 = vmul.f32 %v759, %v617
    %762 = vrot.lane.b32.xlu0 %v759, 32
    %v763 = vpop.permute.xlu0 %762
    %v765 = vmul.f32 %v759, %v763
    %767 = vrot.lane.b32.xlu0 %v765, 32
    %v768 = vpop.permute.xlu0 %767
    %v770 = vadd.f32 %v760, %v768
    %v771 = vtanh.pop %v770
    %773 = vrot.lane.b32.xlu0 %v771, 32
    %v774 = vpop.permute.xlu0 %773
    %v776 = vmul.f32 %v759, %v774
    %s777 = scalar_lea.vmem [#allocation2], 32
    %v778 = vld [vmem:[%s777] sm:$0xff]
    %v779 = vpack.c.bf16 %v698, %v698
    %781 = vrot.lane.b32.xlu0 %v779, 64
    %v782 = vpop.permute.xlu0 %781
    %v784 = vsel %vm229, %v782, 0
    %786 = vmatprep.subr.bf16.mxu0 0
    %787 = vmatpush1.bf16.msra.mxu0 0
    %788 = vmatprep.subr.bf16.mxu0 0
    %789 = vmatpush1.bf16.msra.mxu0 0
    %790 = vmatprep.subr.bf16.mxu0 0
    %791 = vmatpush1.bf16.msra.mxu0 0
    %792 = vmatprep.subr.bf16.mxu0 0
    %793 = vmatpush1.bf16.msra.mxu0 0
    %794 = vmatprep.subr.bf16.mxu0 0
    %795 = vmatpush1.bf16.msra.mxu0 0
    %796 = vmatprep.subr.bf16.mxu0 0
    %797 = vmatpush1.bf16.msra.mxu0 0
    %798 = vmatprep.subr.bf16.mxu0 0
    %799 = vmatpush1.bf16.msra.mxu0 %v303
    %800 = vmatprep.subr.bf16.mxu0 0
    %801 = vmatpush1.bf16.msra.mxu0 %v302
    %802 = vmatprep.subr.bf16.mxu0 0
    %803 = vmatpush2.bf16.msra.mxu0 0
    %804 = vmatprep.subr.bf16.mxu0 0
    %805 = vmatpush2.bf16.msra.mxu0 0
    %806 = vmatprep.subr.bf16.mxu0 0
    %807 = vmatpush2.bf16.msra.mxu0 0
    %808 = vmatprep.subr.bf16.mxu0 0
    %809 = vmatpush2.bf16.msra.mxu0 0
    %810 = vmatprep.subr.bf16.mxu0 0
    %811 = vmatpush2.bf16.msra.mxu0 0
    %812 = vmatprep.subr.bf16.mxu0 0
    %813 = vmatpush2.bf16.msra.mxu0 0
    %814 = vmatprep.subr.bf16.mxu0 0
    %815 = vmatpush2.bf16.msra.mxu0 0
    %816 = vmatprep.subr.bf16.mxu0 0
    %817 = vmatpush2.bf16.msra.mxu0 0
    %818 = vmatprep.mubr.bf16.mxu0 0
    %819 = vmatmul.mubr.bf16.gmra.mxu0 %v784
    %v820 = vpop.f32.mrf.mxu0
    %v821 = vadd.f32 0.0, %v820
    %v822 = vpop.f32.mrf.mxu0
    %v823 = vpop.f32.mrf.mxu0
    %v824 = vpop.f32.mrf.mxu0
    %825 = vdwg.mxu0
    %v826 = vadd.f32 %v778, %v821
    %v827 = vxor.u32 %v826, 2147483648
    %v828 = vmul.f32 %v827, 1.442695
    %v829 = vpow.pop %v828
    %v830 = vadd.f32 %v829, 1.0
    %v831 = vrcp.pop %v830
    %v832 = vmul.f32 1.0, %v831
    %v833 = vtanh.pop %v826
    %v834 = vsel %vm186, %v832, %v833
    %v835 = vmul.f32 %v834, %v692
    %837 = vrot.lane.b32.xlu0 %v834, 32
    %v838 = vpop.permute.xlu0 %837
    %v840 = vmul.f32 %v834, %v838
    %842 = vrot.lane.b32.xlu0 %v840, 32
    %v843 = vpop.permute.xlu0 %842
    %v845 = vadd.f32 %v835, %v843
    %v846 = vtanh.pop %v845
    %848 = vrot.lane.b32.xlu0 %v846, 32
    %v849 = vpop.permute.xlu0 %848
    %v851 = vmul.f32 %v834, %v849
    %853 = vrot.lane.b32.xlu0 %v851, 64
    %v854 = vpop.permute.xlu0 %853
    %857 = vrot.lane.b32.xlu0 %v776, 96
    %v858 = vpop.permute.xlu0 %857
    %v860 = vsel %vm229, %v854, %v858
    %v861 = vpack.c.bf16 %v860, %v860
    %v863 = vsel %vm398, %v861, 0
    %865 = vmatprep.subr.bf16.mxu0 0
    %866 = vmatpush1.bf16.msra.mxu0 0
    %867 = vmatprep.subr.bf16.mxu0 0
    %868 = vmatpush1.bf16.msra.mxu0 0
    %869 = vmatprep.subr.bf16.mxu0 0
    %870 = vmatpush1.bf16.msra.mxu0 0
    %871 = vmatprep.subr.bf16.mxu0 0
    %872 = vmatpush1.bf16.msra.mxu0 0
    %873 = vmatprep.subr.bf16.mxu0 0
    %874 = vmatpush1.bf16.msra.mxu0 %v395
    %875 = vmatprep.subr.bf16.mxu0 0
    %876 = vmatpush1.bf16.msra.mxu0 %v394
    %877 = vmatprep.subr.bf16.mxu0 0
    %878 = vmatpush1.bf16.msra.mxu0 %v226
    %879 = vmatprep.subr.bf16.mxu0 0
    %880 = vmatpush1.bf16.msra.mxu0 %v225
    %881 = vmatprep.subr.bf16.mxu0 0
    %882 = vmatpush2.bf16.msra.mxu0 0
    %883 = vmatprep.subr.bf16.mxu0 0
    %884 = vmatpush2.bf16.msra.mxu0 0
    %885 = vmatprep.subr.bf16.mxu0 0
    %886 = vmatpush2.bf16.msra.mxu0 0
    %887 = vmatprep.subr.bf16.mxu0 0
    %888 = vmatpush2.bf16.msra.mxu0 0
    %889 = vmatprep.subr.bf16.mxu0 0
    %890 = vmatpush2.bf16.msra.mxu0 0
    %891 = vmatprep.subr.bf16.mxu0 0
    %892 = vmatpush2.bf16.msra.mxu0 0
    %893 = vmatprep.subr.bf16.mxu0 0
    %894 = vmatpush2.bf16.msra.mxu0 0
    %895 = vmatprep.subr.bf16.mxu0 0
    %896 = vmatpush2.bf16.msra.mxu0 0
    %897 = vmatprep.mubr.bf16.mxu0 0
    %898 = vmatmul.mubr.bf16.gmra.mxu0 %v863
    %v899 = vpop.f32.mrf.mxu0
    %v900 = vadd.f32 %v212, %v899
    %v901 = vpop.f32.mrf.mxu0
    %v902 = vpop.f32.mrf.mxu0
    %v903 = vpop.f32.mrf.mxu0
    %904 = vdwg.mxu0
    %v905 = vxor.u32 %v900, 2147483648
    %v906 = vmul.f32 %v905, 1.442695
    %v907 = vpow.pop %v906
    %v908 = vadd.f32 %v907, 1.0
    %v909 = vrcp.pop %v908
    %v910 = vmul.f32 1.0, %v909
    %v911 = vtanh.pop %v900
    %v912 = vsel %vm186, %v910, %v911
    %v913 = vmul.f32 %v912, %v770
    %915 = vrot.lane.b32.xlu0 %v912, 32
    %v916 = vpop.permute.xlu0 %915
    %v918 = vmul.f32 %v912, %v916
    %920 = vrot.lane.b32.xlu0 %v918, 32
    %v921 = vpop.permute.xlu0 %920
    %v923 = vadd.f32 %v913, %v921
    %v924 = vtanh.pop %v923
    %926 = vrot.lane.b32.xlu0 %v924, 32
    %v927 = vpop.permute.xlu0 %926
    %v929 = vmul.f32 %v912, %v927
    %s930 = scalar_lea.vmem [#allocation2], 40
    %v931 = vld [vmem:[%s930] sm:$0xff]
    %v932 = vpack.c.bf16 %v851, %v851
    %934 = vrot.lane.b32.xlu0 %v932, 64
    %v935 = vpop.permute.xlu0 %934
    %v937 = vsel %vm229, %v935, 0
    %939 = vmatprep.subr.bf16.mxu0 0
    %940 = vmatpush1.bf16.msra.mxu0 0
    %941 = vmatprep.subr.bf16.mxu0 0
    %942 = vmatpush1.bf16.msra.mxu0 0
    %943 = vmatprep.subr.bf16.mxu0 0
    %944 = vmatpush1.bf16.msra.mxu0 0
    %945 = vmatprep.subr.bf16.mxu0 0
    %946 = vmatpush1.bf16.msra.mxu0 0
    %947 = vmatprep.subr.bf16.mxu0 0
    %948 = vmatpush1.bf16.msra.mxu0 0
    %949 = vmatprep.subr.bf16.mxu0 0
    %950 = vmatpush1.bf16.msra.mxu0 0
    %951 = vmatprep.subr.bf16.mxu0 0
    %952 = vmatpush1.bf16.msra.mxu0 %v303
    %953 = vmatprep.subr.bf16.mxu0 0
    %954 = vmatpush1.bf16.msra.mxu0 %v302
    %955 = vmatprep.subr.bf16.mxu0 0
    %956 = vmatpush2.bf16.msra.mxu0 0
    %957 = vmatprep.subr.bf16.mxu0 0
    %958 = vmatpush2.bf16.msra.mxu0 0
    %959 = vmatprep.subr.bf16.mxu0 0
    %960 = vmatpush2.bf16.msra.mxu0 0
    %961 = vmatprep.subr.bf16.mxu0 0
    %962 = vmatpush2.bf16.msra.mxu0 0
    %963 = vmatprep.subr.bf16.mxu0 0
    %964 = vmatpush2.bf16.msra.mxu0 0
    %965 = vmatprep.subr.bf16.mxu0 0
    %966 = vmatpush2.bf16.msra.mxu0 0
    %967 = vmatprep.subr.bf16.mxu0 0
    %968 = vmatpush2.bf16.msra.mxu0 0
    %969 = vmatprep.subr.bf16.mxu0 0
    %970 = vmatpush2.bf16.msra.mxu0 0
    %971 = vmatprep.mubr.bf16.mxu0 0
    %972 = vmatmul.mubr.bf16.gmra.mxu0 %v937
    %v973 = vpop.f32.mrf.mxu0
    %v974 = vadd.f32 0.0, %v973
    %v975 = vpop.f32.mrf.mxu0
    %v976 = vpop.f32.mrf.mxu0
    %v977 = vpop.f32.mrf.mxu0
    %978 = vdwg.mxu0
    %v979 = vadd.f32 %v931, %v974
    %v980 = vxor.u32 %v979, 2147483648
    %v981 = vmul.f32 %v980, 1.442695
    %v982 = vpow.pop %v981
    %v983 = vadd.f32 %v982, 1.0
    %v984 = vrcp.pop %v983
    %v985 = vmul.f32 1.0, %v984
    %v986 = vtanh.pop %v979
    %v987 = vsel %vm186, %v985, %v986
    %v988 = vmul.f32 %v987, %v845
    %990 = vrot.lane.b32.xlu0 %v987, 32
    %v991 = vpop.permute.xlu0 %990
    %v993 = vmul.f32 %v987, %v991
    %995 = vrot.lane.b32.xlu0 %v993, 32
    %v996 = vpop.permute.xlu0 %995
    %v998 = vadd.f32 %v988, %v996
    %v999 = vtanh.pop %v998
    %1001 = vrot.lane.b32.xlu0 %v999, 32
    %v1002 = vpop.permute.xlu0 %1001
    %v1004 = vmul.f32 %v987, %v1002
    %1006 = vrot.lane.b32.xlu0 %v1004, 64
    %v1007 = vpop.permute.xlu0 %1006
    %1010 = vrot.lane.b32.xlu0 %v929, 96
    %v1011 = vpop.permute.xlu0 %1010
    %v1013 = vsel %vm229, %v1007, %v1011
    %v1014 = vpack.c.bf16 %v1013, %v1013
    %v1016 = vsel %vm398, %v1014, 0
    %1018 = vmatprep.subr.bf16.mxu0 0
    %1019 = vmatpush1.bf16.msra.mxu0 0
    %1020 = vmatprep.subr.bf16.mxu0 0
    %1021 = vmatpush1.bf16.msra.mxu0 0
    %1022 = vmatprep.subr.bf16.mxu0 0
    %1023 = vmatpush1.bf16.msra.mxu0 0
    %1024 = vmatprep.subr.bf16.mxu0 0
    %1025 = vmatpush1.bf16.msra.mxu0 0
    %1026 = vmatprep.subr.bf16.mxu0 0
    %1027 = vmatpush1.bf16.msra.mxu0 %v395
    %1028 = vmatprep.subr.bf16.mxu0 0
    %1029 = vmatpush1.bf16.msra.mxu0 %v394
    %1030 = vmatprep.subr.bf16.mxu0 0
    %1031 = vmatpush1.bf16.msra.mxu0 %v226
    %1032 = vmatprep.subr.bf16.mxu0 0
    %1033 = vmatpush1.bf16.msra.mxu0 %v225
    %1034 = vmatprep.subr.bf16.mxu0 0
    %1035 = vmatpush2.bf16.msra.mxu0 0
    %1036 = vmatprep.subr.bf16.mxu0 0
    %1037 = vmatpush2.bf16.msra.mxu0 0
    %1038 = vmatprep.subr.bf16.mxu0 0
    %1039 = vmatpush2.bf16.msra.mxu0 0
    %1040 = vmatprep.subr.bf16.mxu0 0
    %1041 = vmatpush2.bf16.msra.mxu0 0
    %1042 = vmatprep.subr.bf16.mxu0 0
    %1043 = vmatpush2.bf16.msra.mxu0 0
    %1044 = vmatprep.subr.bf16.mxu0 0
    %1045 = vmatpush2.bf16.msra.mxu0 0
    %1046 = vmatprep.subr.bf16.mxu0 0
    %1047 = vmatpush2.bf16.msra.mxu0 0
    %1048 = vmatprep.subr.bf16.mxu0 0
    %1049 = vmatpush2.bf16.msra.mxu0 0
    %1050 = vmatprep.mubr.bf16.mxu0 0
    %1051 = vmatmul.mubr.bf16.gmra.mxu0 %v1016
    %v1052 = vpop.f32.mrf.mxu0
    %v1053 = vadd.f32 %v212, %v1052
    %v1054 = vpop.f32.mrf.mxu0
    %v1055 = vpop.f32.mrf.mxu0
    %v1056 = vpop.f32.mrf.mxu0
    %1057 = vdwg.mxu0
    %v1058 = vxor.u32 %v1053, 2147483648
    %v1059 = vmul.f32 %v1058, 1.442695
    %v1060 = vpow.pop %v1059
    %v1061 = vadd.f32 %v1060, 1.0
    %v1062 = vrcp.pop %v1061
    %v1063 = vmul.f32 1.0, %v1062
    %v1064 = vtanh.pop %v1053
    %v1065 = vsel %vm186, %v1063, %v1064
    %v1066 = vmul.f32 %v1065, %v923
    %1068 = vrot.lane.b32.xlu0 %v1065, 32
    %v1069 = vpop.permute.xlu0 %1068
    %v1071 = vmul.f32 %v1065, %v1069
    %1073 = vrot.lane.b32.xlu0 %v1071, 32
    %v1074 = vpop.permute.xlu0 %1073
    %v1076 = vadd.f32 %v1066, %v1074
    %v1077 = vtanh.pop %v1076
    %1079 = vrot.lane.b32.xlu0 %v1077, 32
    %v1080 = vpop.permute.xlu0 %1079
    %v1082 = vmul.f32 %v1065, %v1080
    %s1083 = scalar_lea.vmem [#allocation2], 48
    %v1084 = vld [vmem:[%s1083] sm:$0xff]
    %v1085 = vpack.c.bf16 %v1004, %v1004
    %1087 = vrot.lane.b32.xlu0 %v1085, 64
    %v1088 = vpop.permute.xlu0 %1087
    %v1090 = vsel %vm229, %v1088, 0
    %1092 = vmatprep.subr.bf16.mxu0 0
    %1093 = vmatpush1.bf16.msra.mxu0 0
    %1094 = vmatprep.subr.bf16.mxu0 0
    %1095 = vmatpush1.bf16.msra.mxu0 0
    %1096 = vmatprep.subr.bf16.mxu0 0
    %1097 = vmatpush1.bf16.msra.mxu0 0
    %1098 = vmatprep.subr.bf16.mxu0 0
    %1099 = vmatpush1.bf16.msra.mxu0 0
    %1100 = vmatprep.subr.bf16.mxu0 0
    %1101 = vmatpush1.bf16.msra.mxu0 0
    %1102 = vmatprep.subr.bf16.mxu0 0
    %1103 = vmatpush1.bf16.msra.mxu0 0
    %1104 = vmatprep.subr.bf16.mxu0 0
    %1105 = vmatpush1.bf16.msra.mxu0 %v303
    %1106 = vmatprep.subr.bf16.mxu0 0
    %1107 = vmatpush1.bf16.msra.mxu0 %v302
    %1108 = vmatprep.subr.bf16.mxu0 0
    %1109 = vmatpush2.bf16.msra.mxu0 0
    %1110 = vmatprep.subr.bf16.mxu0 0
    %1111 = vmatpush2.bf16.msra.mxu0 0
    %1112 = vmatprep.subr.bf16.mxu0 0
    %1113 = vmatpush2.bf16.msra.mxu0 0
    %1114 = vmatprep.subr.bf16.mxu0 0
    %1115 = vmatpush2.bf16.msra.mxu0 0
    %1116 = vmatprep.subr.bf16.mxu0 0
    %1117 = vmatpush2.bf16.msra.mxu0 0
    %1118 = vmatprep.subr.bf16.mxu0 0
    %1119 = vmatpush2.bf16.msra.mxu0 0
    %1120 = vmatprep.subr.bf16.mxu0 0
    %1121 = vmatpush2.bf16.msra.mxu0 0
    %1122 = vmatprep.subr.bf16.mxu0 0
    %1123 = vmatpush2.bf16.msra.mxu0 0
    %1124 = vmatprep.mubr.bf16.mxu0 0
    %1125 = vmatmul.mubr.bf16.gmra.mxu0 %v1090
    %v1126 = vpop.f32.mrf.mxu0
    %v1127 = vadd.f32 0.0, %v1126
    %v1128 = vpop.f32.mrf.mxu0
    %v1129 = vpop.f32.mrf.mxu0
    %v1130 = vpop.f32.mrf.mxu0
    %1131 = vdwg.mxu0
    %v1132 = vadd.f32 %v1084, %v1127
    %v1133 = vxor.u32 %v1132, 2147483648
    %v1134 = vmul.f32 %v1133, 1.442695
    %v1135 = vpow.pop %v1134
    %v1136 = vadd.f32 %v1135, 1.0
    %v1137 = vrcp.pop %v1136
    %v1138 = vmul.f32 1.0, %v1137
    %v1139 = vtanh.pop %v1132
    %v1140 = vsel %vm186, %v1138, %v1139
    %v1141 = vmul.f32 %v1140, %v998
    %1143 = vrot.lane.b32.xlu0 %v1140, 32
    %v1144 = vpop.permute.xlu0 %1143
    %v1146 = vmul.f32 %v1140, %v1144
    %1148 = vrot.lane.b32.xlu0 %v1146, 32
    %v1149 = vpop.permute.xlu0 %1148
    %v1151 = vadd.f32 %v1141, %v1149
    %v1152 = vtanh.pop %v1151
    %1154 = vrot.lane.b32.xlu0 %v1152, 32
    %v1155 = vpop.permute.xlu0 %1154
    %v1157 = vmul.f32 %v1140, %v1155
    %1159 = vrot.lane.b32.xlu0 %v1157, 64
    %v1160 = vpop.permute.xlu0 %1159
    %1163 = vrot.lane.b32.xlu0 %v1082, 96
    %v1164 = vpop.permute.xlu0 %1163
    %v1166 = vsel %vm229, %v1160, %v1164
    %v1167 = vpack.c.bf16 %v1166, %v1166
    %v1169 = vsel %vm398, %v1167, 0
    %1171 = vmatprep.subr.bf16.mxu0 0
    %1172 = vmatpush1.bf16.msra.mxu0 0
    %1173 = vmatprep.subr.bf16.mxu0 0
    %1174 = vmatpush1.bf16.msra.mxu0 0
    %1175 = vmatprep.subr.bf16.mxu0 0
    %1176 = vmatpush1.bf16.msra.mxu0 0
    %1177 = vmatprep.subr.bf16.mxu0 0
    %1178 = vmatpush1.bf16.msra.mxu0 0
    %1179 = vmatprep.subr.bf16.mxu0 0
    %1180 = vmatpush1.bf16.msra.mxu0 %v395
    %1181 = vmatprep.subr.bf16.mxu0 0
    %1182 = vmatpush1.bf16.msra.mxu0 %v394
    %1183 = vmatprep.subr.bf16.mxu0 0
    %1184 = vmatpush1.bf16.msra.mxu0 %v226
    %1185 = vmatprep.subr.bf16.mxu0 0
    %1186 = vmatpush1.bf16.msra.mxu0 %v225
    %1187 = vmatprep.subr.bf16.mxu0 0
    %1188 = vmatpush2.bf16.msra.mxu0 0
    %1189 = vmatprep.subr.bf16.mxu0 0
    %1190 = vmatpush2.bf16.msra.mxu0 0
    %1191 = vmatprep.subr.bf16.mxu0 0
    %1192 = vmatpush2.bf16.msra.mxu0 0
    %1193 = vmatprep.subr.bf16.mxu0 0
    %1194 = vmatpush2.bf16.msra.mxu0 0
    %1195 = vmatprep.subr.bf16.mxu0 0
    %1196 = vmatpush2.bf16.msra.mxu0 0
    %1197 = vmatprep.subr.bf16.mxu0 0
    %1198 = vmatpush2.bf16.msra.mxu0 0
    %1199 = vmatprep.subr.bf16.mxu0 0
    %1200 = vmatpush2.bf16.msra.mxu0 0
    %1201 = vmatprep.subr.bf16.mxu0 0
    %1202 = vmatpush2.bf16.msra.mxu0 0
    %1203 = vmatprep.mubr.bf16.mxu0 0
    %1204 = vmatmul.mubr.bf16.gmra.mxu0 %v1169
    %v1205 = vpop.f32.mrf.mxu0
    %v1206 = vadd.f32 %v212, %v1205
    %v1207 = vpop.f32.mrf.mxu0
    %v1208 = vpop.f32.mrf.mxu0
    %v1209 = vpop.f32.mrf.mxu0
    %1210 = vdwg.mxu0
    %v1211 = vxor.u32 %v1206, 2147483648
    %v1212 = vmul.f32 %v1211, 1.442695
    %v1213 = vpow.pop %v1212
    %v1214 = vadd.f32 %v1213, 1.0
    %v1215 = vrcp.pop %v1214
    %v1216 = vmul.f32 1.0, %v1215
    %v1217 = vtanh.pop %v1206
    %v1218 = vsel %vm186, %v1216, %v1217
    %v1219 = vmul.f32 %v1218, %v1076
    %1221 = vrot.lane.b32.xlu0 %v1218, 32
    %v1222 = vpop.permute.xlu0 %1221
    %v1224 = vmul.f32 %v1218, %v1222
    %1226 = vrot.lane.b32.xlu0 %v1224, 32
    %v1227 = vpop.permute.xlu0 %1226
    %v1229 = vadd.f32 %v1219, %v1227
    %v1230 = vtanh.pop %v1229
    %1232 = vrot.lane.b32.xlu0 %v1230, 32
    %v1233 = vpop.permute.xlu0 %1232
    %v1235 = vmul.f32 %v1218, %v1233
    %s1236 = scalar_lea.vmem [#allocation2], 56
    %v1237 = vld [vmem:[%s1236] sm:$0xff]
    %v1238 = vpack.c.bf16 %v1157, %v1157
    %1240 = vrot.lane.b32.xlu0 %v1238, 64
    %v1241 = vpop.permute.xlu0 %1240
    %v1243 = vsel %vm229, %v1241, 0
    %1245 = vmatprep.subr.bf16.mxu0 0
    %1246 = vmatpush1.bf16.msra.mxu0 0
    %1247 = vmatprep.subr.bf16.mxu0 0
    %1248 = vmatpush1.bf16.msra.mxu0 0
    %1249 = vmatprep.subr.bf16.mxu0 0
    %1250 = vmatpush1.bf16.msra.mxu0 0
    %1251 = vmatprep.subr.bf16.mxu0 0
    %1252 = vmatpush1.bf16.msra.mxu0 0
    %1253 = vmatprep.subr.bf16.mxu0 0
    %1254 = vmatpush1.bf16.msra.mxu0 0
    %1255 = vmatprep.subr.bf16.mxu0 0
    %1256 = vmatpush1.bf16.msra.mxu0 0
    %1257 = vmatprep.subr.bf16.mxu0 0
    %1258 = vmatpush1.bf16.msra.mxu0 %v303
    %1259 = vmatprep.subr.bf16.mxu0 0
    %1260 = vmatpush1.bf16.msra.mxu0 %v302
    %1261 = vmatprep.subr.bf16.mxu0 0
    %1262 = vmatpush2.bf16.msra.mxu0 0
    %1263 = vmatprep.subr.bf16.mxu0 0
    %1264 = vmatpush2.bf16.msra.mxu0 0
    %1265 = vmatprep.subr.bf16.mxu0 0
    %1266 = vmatpush2.bf16.msra.mxu0 0
    %1267 = vmatprep.subr.bf16.mxu0 0
    %1268 = vmatpush2.bf16.msra.mxu0 0
    %1269 = vmatprep.subr.bf16.mxu0 0
    %1270 = vmatpush2.bf16.msra.mxu0 0
    %1271 = vmatprep.subr.bf16.mxu0 0
    %1272 = vmatpush2.bf16.msra.mxu0 0
    %1273 = vmatprep.subr.bf16.mxu0 0
    %1274 = vmatpush2.bf16.msra.mxu0 0
    %1275 = vmatprep.subr.bf16.mxu0 0
    %1276 = vmatpush2.bf16.msra.mxu0 0
    %1277 = vmatprep.mubr.bf16.mxu0 0
    %1278 = vmatmul.mubr.bf16.gmra.mxu0 %v1243
    %v1279 = vpop.f32.mrf.mxu0
    %v1280 = vadd.f32 0.0, %v1279
    %v1281 = vpop.f32.mrf.mxu0
    %v1282 = vpop.f32.mrf.mxu0
    %v1283 = vpop.f32.mrf.mxu0
    %1284 = vdwg.mxu0
    %v1285 = vadd.f32 %v1237, %v1280
    %v1286 = vxor.u32 %v1285, 2147483648
    %v1287 = vmul.f32 %v1286, 1.442695
    %v1288 = vpow.pop %v1287
    %v1289 = vadd.f32 %v1288, 1.0
    %v1290 = vrcp.pop %v1289
    %v1291 = vmul.f32 1.0, %v1290
    %v1292 = vtanh.pop %v1285
    %v1293 = vsel %vm186, %v1291, %v1292
    %v1294 = vmul.f32 %v1293, %v1151
    %1296 = vrot.lane.b32.xlu0 %v1293, 32
    %v1297 = vpop.permute.xlu0 %1296
    %v1299 = vmul.f32 %v1293, %v1297
    %1301 = vrot.lane.b32.xlu0 %v1299, 32
    %v1302 = vpop.permute.xlu0 %1301
    %v1304 = vadd.f32 %v1294, %v1302
    %v1305 = vtanh.pop %v1304
    %1307 = vrot.lane.b32.xlu0 %v1305, 32
    %v1308 = vpop.permute.xlu0 %1307
    %v1310 = vmul.f32 %v1293, %v1308
    %1312 = vrot.lane.b32.xlu0 %v1310, 64
    %v1313 = vpop.permute.xlu0 %1312
    %1316 = vrot.lane.b32.xlu0 %v1235, 96
    %v1317 = vpop.permute.xlu0 %1316
    %v1319 = vsel %vm229, %v1313, %v1317
    %v1320 = vpack.c.bf16 %v1319, %v1319
    %v1322 = vsel %vm398, %v1320, 0
    %1324 = vmatprep.subr.bf16.mxu0 0
    %1325 = vmatpush1.bf16.msra.mxu0 0
    %1326 = vmatprep.subr.bf16.mxu0 0
    %1327 = vmatpush1.bf16.msra.mxu0 0
    %1328 = vmatprep.subr.bf16.mxu0 0
    %1329 = vmatpush1.bf16.msra.mxu0 0
    %1330 = vmatprep.subr.bf16.mxu0 0
    %1331 = vmatpush1.bf16.msra.mxu0 0
    %1332 = vmatprep.subr.bf16.mxu0 0
    %1333 = vmatpush1.bf16.msra.mxu0 %v395
    %1334 = vmatprep.subr.bf16.mxu0 0
    %1335 = vmatpush1.bf16.msra.mxu0 %v394
    %1336 = vmatprep.subr.bf16.mxu0 0
    %1337 = vmatpush1.bf16.msra.mxu0 %v226
    %1338 = vmatprep.subr.bf16.mxu0 0
    %1339 = vmatpush1.bf16.msra.mxu0 %v225
    %1340 = vmatprep.subr.bf16.mxu0 0
    %1341 = vmatpush2.bf16.msra.mxu0 0
    %1342 = vmatprep.subr.bf16.mxu0 0
    %1343 = vmatpush2.bf16.msra.mxu0 0
    %1344 = vmatprep.subr.bf16.mxu0 0
    %1345 = vmatpush2.bf16.msra.mxu0 0
    %1346 = vmatprep.subr.bf16.mxu0 0
    %1347 = vmatpush2.bf16.msra.mxu0 0
    %1348 = vmatprep.subr.bf16.mxu0 0
    %1349 = vmatpush2.bf16.msra.mxu0 0
    %1350 = vmatprep.subr.bf16.mxu0 0
    %1351 = vmatpush2.bf16.msra.mxu0 0
    %1352 = vmatprep.subr.bf16.mxu0 0
    %1353 = vmatpush2.bf16.msra.mxu0 0
    %1354 = vmatprep.subr.bf16.mxu0 0
    %1355 = vmatpush2.bf16.msra.mxu0 0
    %1356 = vmatprep.mubr.bf16.mxu0 0
    %1357 = vmatmul.mubr.bf16.gmra.mxu0 %v1322
    %v1358 = vpop.f32.mrf.mxu0
    %v1359 = vadd.f32 %v212, %v1358
    %v1360 = vpop.f32.mrf.mxu0
    %v1361 = vpop.f32.mrf.mxu0
    %v1362 = vpop.f32.mrf.mxu0
    %1363 = vdwg.mxu0
    %v1364 = vxor.u32 %v1359, 2147483648
    %v1365 = vmul.f32 %v1364, 1.442695
    %v1366 = vpow.pop %v1365
    %v1367 = vadd.f32 %v1366, 1.0
    %v1368 = vrcp.pop %v1367
    %v1369 = vmul.f32 1.0, %v1368
    %v1370 = vtanh.pop %v1359
    %v1371 = vsel %vm186, %v1369, %v1370
    %v1372 = vmul.f32 %v1371, %v1229
    %1374 = vrot.lane.b32.xlu0 %v1371, 32
    %v1375 = vpop.permute.xlu0 %1374
    %v1377 = vmul.f32 %v1371, %v1375
    %1379 = vrot.lane.b32.xlu0 %v1377, 32
    %v1380 = vpop.permute.xlu0 %1379
    %v1382 = vadd.f32 %v1372, %v1380
    %v1383 = vtanh.pop %v1382
    %1385 = vrot.lane.b32.xlu0 %v1383, 32
    %v1386 = vpop.permute.xlu0 %1385
    %v1388 = vmul.f32 %v1371, %v1386
    %v1389 = vld [vmem:[%s6] sm:$0x1]
    %v1391 = vlaneseq
    %v1392 = vshrl.u32 %v1391, 7
    %v1393 = vsub.s32 0, %v1392
    %v1394 = vrot.slane %v1389, %v1393
    %1395 = vrot.lane.b32.xlu0 %v1394, 64
    %v1396 = vpop.permute.xlu0 %1395
    %v1398 = vmul.f32 %v1388, %v1396
    %1400 = vrot.lane.b32.xlu0 %v1398, 64
    %v1401 = vpop.permute.xlu0 %1400
    %v1403 = vsel %vm229, %v1401, 0.0
    %1404 = vadd.xlane.f32.xlu0 %v1403
    %v1405 = vpop.xlane.xlu0 %1404
    %s1406 = sld [smem:[#allocation3]]
    %v1407 = vstv %s1406
    %v1408 = vadd.f32 %v1405, %v1407
    %vm1409 = vcmask 7168
    %1410 = vst.msk [vmem:[%s8] sm:$0xff] %vm1409, %v1408
    // Predicated region
    $region38: #{tpu_custom_call.1} parent=1 // pred_check
      _
    $region39: #{tpu_custom_call.1} parent=1 // pred_check_branch
      %1412 = sbr.rel (0) target = $region41
    $region40: #{tpu_custom_call.1} parent=1 // pred_region
      _
    $region41: #{tpu_custom_call.1} parent=1 // pred_fallthru
      _
    // Predicated region
    $region42: #{tpu_custom_call.1} parent=1 // pred_check
      _
    $region43: #{tpu_custom_call.1} parent=1 // pred_check_branch
      %1414 = sbr.rel (0) target = $region45
    $region44: #{tpu_custom_call.1} parent=1 // pred_region
      _
    $region45: #{tpu_custom_call.1} parent=1 // pred_fallthru
      _
    %1415 = vsyncpa [#allocation5], 1

</llo_original>
